<compile_context>
chip_gen: v6e
topology: v6e:2x2x1
jax: 0.10.0
libtpu: 0.0.40
codegen_flags: <defaults>
</compile_context>

<pallas_src>
import jax
import jax.numpy as jnp
from jax.experimental import pallas as pl
from jax.experimental.pallas import tpu as pltpu


def _round_up(n, m):
    return (n + m - 1) // m * m


def _vmem_capacity_bytes():
    """Best-effort physical VMEM capacity; conservative (v7x-sized) fallback."""
    try:
        info = pltpu.get_tpu_info()
        for name in ("vmem_capacity_bytes", "vmem_size_bytes", "vmem_bytes"):
            v = getattr(info, name, None)
            if v:
                return int(v)
    except Exception:
        pass
    return 64 * 2**20


def _step_vmem_bytes(TH, W, Cp, O, Op):
    """Full per-grid-step VMEM footprint (not just the input tile)."""
    Wp = W + 2
    in_main = TH * Wp * Cp * 2           # bf16 main haloed rows
    in_halo = 2 * Wp * Cp * 2            # two bf16 halo rows
    out_t = TH * W * O * 2               # bf16 output tile (unpadded O)
    weights = 9 * Cp * 2 + Op * 4 + Cp * Op * 2
    views = 3 * TH * W * Cp * 2          # materialized column-shifted views
    acc = TH * W * Cp * 2                # depthwise accumulator scratch
    mm = TH * W * Op * 4                 # f32 matmul result before slice/cast
    # pipelined arrays are double-buffered; scratch / in-kernel temporaries are single.
    return 2 * (in_main + in_halo + out_t + weights) + views + acc + mm


def _pick_tile_h(H, W, Cp, O, Op, budget_bytes, B=1):
    """Largest divisor TH of H whose full per-step footprint fits the budget.

    If B == 1, prefer TH <= H/2 so the (B, H/TH) grid has >= 2 parallel steps
    (keeps both TensorCores busy on 2-TC chips)."""
    fits = [th for th in range(1, H + 1)
            if H % th == 0 and _step_vmem_bytes(th, W, Cp, O, Op) <= budget_bytes]
    if not fits:
        return 1  # smallest tile; may exceed the budget but stays correct
    if B == 1:
        multi = [th for th in fits if H // th >= 2]
        if multi:
            return max(multi)
    return max(fits)


def _sepconv_kernel(xm_ref, xh0_ref, xh1_ref, wd_ref, bpw_ref, wp_ref, o_ref, acc_ref):
    # xm_ref : (1, TH, W+2, Cp) bf16  main rows of the zero-padded input tile
    # xh0_ref: (1, 1,  W+2, Cp) bf16  halo row TH   (first row below the main rows)
    # xh1_ref: (1, 1,  W+2, Cp) bf16  halo row TH+1 (second row below the main rows)
    # wd_ref : (9, Cp)          bf16  normalized depthwise weights (gain folded, row = ky*3+kx)
    # bpw_ref: (1, Op)          f32   conv1 bias pushed through pointwise weights (gains folded)
    # wp_ref : (Cp, Op)         bf16  normalized pointwise weights (gain folded)
    # o_ref  : (1, TH, W, O)    bf16
    # acc_ref: (TH, W, Cp)      bf16  VMEM scratch accumulator for the depthwise stage
    TH, W, O = o_ref.shape[1], o_ref.shape[2], o_ref.shape[3]
    Cp = acc_ref.shape[2]

    xm = xm_ref[0]                       # (TH, Wp, Cp)
    wd = wd_ref[...]                     # (9, Cp)

    # Three column-shifted views of the main rows, hoisted once (3 sublane-shift copies,
    # reused for every ky). Row (ky) shifts below are free slices on the untiled major axis.
    m0 = xm[:, 0:W, :]
    m1 = xm[:, 1:W + 1, :]
    m2 = xm[:, 2:W + 2, :]

    # Halo rows (padded rows TH and TH+1 of this tile) and their column views (single rows).
    h0 = xh0_ref[0, 0:1]                 # (1, Wp, Cp)
    h1 = xh1_ref[0, 0:1]
    h0c = (h0[:, 0:W, :], h0[:, 1:W + 1, :], h0[:, 2:W + 2, :])
    h1c = (h1[:, 0:W, :], h1[:, 1:W + 1, :], h1[:, 2:W + 2, :])

    # Depthwise 3x3 (cross-correlation, padding=1), accumulated in VMEM scratch.
    # ky = 0: every output row reads main rows 0..TH-1.
    acc_ref[...] = m0 * wd[0] + m1 * wd[1] + m2 * wd[2]
    # ky = 1: output rows 0..TH-2 read main rows 1..TH-1; row TH-1 reads halo row 0.
    if TH > 1:
        acc_ref[0:TH - 1] += m0[1:TH] * wd[3] + m1[1:TH] * wd[4] + m2[1:TH] * wd[5]
    acc_ref[TH - 1:TH] += h0c[0] * wd[3] + h0c[1] * wd[4] + h0c[2] * wd[5]
    # ky = 2: rows 0..TH-3 read main rows 2..TH-1; row TH-2 reads halo row 0; row TH-1 halo row 1.
    if TH > 2:
        acc_ref[0:TH - 2] += m0[2:TH] * wd[6] + m1[2:TH] * wd[7] + m2[2:TH] * wd[8]
    if TH > 1:
        acc_ref[TH - 2:TH - 1] += h0c[0] * wd[6] + h0c[1] * wd[7] + h0c[2] * wd[8]
    acc_ref[TH - 1:TH] += h1c[0] * wd[6] + h1c[1] * wd[7] + h1c[2] * wd[8]

    # Pointwise 1x1 on the MXU: bf16 x bf16 operands, f32 accumulate. Bias (already pushed
    # through the pointwise weights in the wrapper) is added in f32, then only the first O
    # (real) output channels are stored -> no write amplification for small O.
    y = jnp.dot(acc_ref[...].reshape(TH * W, Cp), wp_ref[...],
                preferred_element_type=jnp.float32)
    y = y + bpw_ref[...]
    o_ref[0] = y[:, :O].reshape(TH, W, O).astype(o_ref.dtype)


def separable_conv2d(x_nchw, w_dw, b_dw, w_pw, gain=1.0, tile_h=None):
    """x_nchw: (B, C, H, W);  w_dw: (C, 1, 3, 3);  b_dw: (C,);  w_pw: (O, C, 1, 1)."""
    B, C, H, W = x_nchw.shape
    O = w_pw.shape[0]
    orig_dtype = x_nchw.dtype

    # --- parameter prep (tiny tensors, wrapper-side glue): per-out-channel L2 weight norm ---
    wd_n = w_dw * jax.lax.rsqrt(jnp.sum(jnp.square(w_dw), axis=(1, 2, 3)) + 1e-8)[:, None, None, None]
    wp_n = w_pw * jax.lax.rsqrt(jnp.sum(jnp.square(w_pw), axis=(1, 2, 3)) + 1e-8)[:, None, None, None]

    g = jnp.float32(gain)
    wd_f = (wd_n * g).astype(jnp.float32)          # conv1 gain folded into depthwise weights
    wp_mat = (wp_n[:, :, 0, 0] * g).astype(jnp.float32)   # (O, C), conv2 gain folded in
    # conv1 bias pushed through the pointwise stage:  wp_f @ (b * g)  (exact algebraic fold)
    b_pw = wp_mat @ (b_dw.astype(jnp.float32) * g)  # (O,) f32

    # Lane-dense padding for the MXU contraction / weight dims (zero channels are inert).
    Cp = _round_up(C, 128)
    Op = _round_up(O, 128)

    # Layout plumbing (glue): NCHW -> NHWC bf16, 1-px spatial halo + channel pad in one op.
    # bf16 halves this round trip vs. the f32 version; fully removing it would need in-kernel
    # border clamping with manual DMA (not done here).
    x_nhwc = jnp.transpose(x_nchw, (0, 2, 3, 1)).astype(jnp.bfloat16)
    xp = jnp.pad(x_nhwc, ((0, 0), (1, 1), (1, 1), (0, Cp - C)))          # (B, H+2, W+2, Cp)

    wd_k = jnp.pad(jnp.transpose(wd_f[:, 0], (1, 2, 0)).reshape(9, C),
                   ((0, 0), (0, Cp - C))).astype(jnp.bfloat16)           # (9, Cp)
    wp_k = jnp.pad(jnp.transpose(wp_mat, (1, 0)),
                   ((0, Cp - C), (0, Op - O))).astype(jnp.bfloat16)      # (Cp, Op)
    bpw_k = jnp.pad(b_pw.reshape(1, O), ((0, 0), (0, Op - O)))           # (1, Op) f32

    # Per-chip VMEM budget: big tiles on 128 MiB parts (v5e/v6e), tight accounting on 64 MiB (v7x).
    cap = _vmem_capacity_bytes()
    vmem_limit = (40 << 20) if cap <= (64 << 20) else (96 << 20)
    budget = vmem_limit - (6 << 20)

    TH = tile_h if tile_h is not None else _pick_tile_h(H, W, Cp, O, Op, budget, B=B)
    assert H % TH == 0, "tile_h must divide H"
    nH = H // TH
    Wp = W + 2

    out_nhwc = pl.pallas_call(
        _sepconv_kernel,
        out_shape=jax.ShapeDtypeStruct((B, H, W, O), jnp.bfloat16),
        grid_spec=pltpu.PrefetchScalarGridSpec(
            num_scalar_prefetch=0,
            grid=(B, nH),
            in_specs=[
                # main TH rows of the padded input for this tile
                pl.BlockSpec((1, TH, Wp, Cp), lambda b, h: (b, h, 0, 0)),
                # two 1-row halo blocks; block height is exactly 1 so block index == element row
                pl.BlockSpec((1, 1, Wp, Cp), lambda b, h: (b, h * TH + TH, 0, 0)),
                pl.BlockSpec((1, 1, Wp, Cp), lambda b, h: (b, h * TH + TH + 1, 0, 0)),
                pl.BlockSpec((9, Cp), lambda b, h: (0, 0)),              # depthwise w (bf16)
                pl.BlockSpec((1, Op), lambda b, h: (0, 0)),              # bias through pointwise (f32)
                pl.BlockSpec((Cp, Op), lambda b, h: (0, 0)),             # pointwise w (bf16)
            ],
            out_specs=pl.BlockSpec((1, TH, W, O), lambda b, h: (b, h, 0, 0)),
            scratch_shapes=[pltpu.VMEM((TH, W, Cp), jnp.bfloat16)],
        ),
        compiler_params=pltpu.CompilerParams(
            dimension_semantics=("parallel", "parallel"),
            vmem_limit_bytes=vmem_limit,
        ),
    )(xp, xp, xp, wd_k, bpw_k, wp_k)

    # Back to NCHW in the caller's dtype (cast fuses with the transpose copy).
    return jnp.transpose(out_nhwc, (0, 3, 1, 2)).astype(orig_dtype)


def _reference(x_nchw, w_dw, b_dw, w_pw, gain=1.0):
    """Pure-JAX f32 reference matching the PyTorch forward."""
    C = x_nchw.shape[1]
    wd_n = w_dw * jax.lax.rsqrt(jnp.sum(jnp.square(w_dw), axis=(1, 2, 3)) + 1e-8)[:, None, None, None]
    wp_n = w_pw * jax.lax.rsqrt(jnp.sum(jnp.square(w_pw), axis=(1, 2, 3)) + 1e-8)[:, None, None, None]
    dn = ("NCHW", "OIHW", "NCHW")
    y = jax.lax.conv_general_dilated(x_nchw, wd_n, (1, 1), "SAME",
                                     feature_group_count=C, dimension_numbers=dn)
    y = (y + b_dw.reshape(1, -1, 1, 1)) * gain
    y = jax.lax.conv_general_dilated(y, wp_n, (1, 1), "VALID", dimension_numbers=dn)
    return y * gain


if __name__ == "__main__":
    B, C, H, W, O = 2, 4, 16, 16, 8

    key = jax.random.PRNGKey(0)
    k_dw, k_pw, k_b, k_x = jax.random.split(key, 4)

    # Parameters matching the module's __init__ shapes (nonzero bias exercises the bias fold).
    w_dw = jax.random.normal(k_dw, (C, 1, 3, 3), jnp.float32)    # conv1 weight (groups=C)
    b_dw = 0.1 * jax.random.normal(k_b, (C,), jnp.float32)       # conv1 bias
    w_pw = jax.random.normal(k_pw, (O, C, 1, 1), jnp.float32)    # conv2 weight (no bias)
    # TODO(synk): conv2's optional noise path (use_noise=True) and up/down resampling are
    # disabled by default in the module and not implemented here.

    x = jax.random.normal(k_x, (B, C, H, W), jnp.float32)
    gain = 1.3

    y_ref = _reference(x, w_dw, b_dw, w_pw, gain=gain)

    # tile_h=8 -> two H-tiles per batch element, so the cross-tile halo path is exercised.
    y = separable_conv2d(x, w_dw, b_dw, w_pw, gain=gain, tile_h=8)
    y = jax.block_until_ready(y)
    assert y.shape == (B, O, H, W)
    # Tolerance accounts for bf16 I/O + bf16 depthwise + bf16 MXU operands (f32 accumulate);
    # genuine algorithmic errors are O(1) and would still trip this check.
    err = float(jnp.max(jnp.abs(y - y_ref)))
    assert jnp.allclose(y, y_ref, atol=1e-1, rtol=5e-2), err

    # Also exercise the automatic tile picker / VMEM-budget path.
    y2 = jax.block_until_ready(separable_conv2d(x, w_dw, b_dw, w_pw, gain=gain))
    err2 = float(jnp.max(jnp.abs(y2 - y_ref)))
    assert jnp.allclose(y2, y_ref, atol=1e-1, rtol=5e-2), err2

    print("KERNEL_OK")
</pallas_src>

<mosaic_0001>
module attributes {stable_mosaic.version = 11 : i64} {
  func.func @_sepconv_kernel(%arg0: i32, %arg1: i32, %arg2: memref<1x8x18x128xbf16, #tpu.memory_space<vmem>>, %arg3: memref<1x1x18x128xbf16, #tpu.memory_space<vmem>>, %arg4: memref<1x1x18x128xbf16, #tpu.memory_space<vmem>>, %arg5: memref<9x128xbf16, #tpu.memory_space<vmem>>, %arg6: memref<1x128xf32, #tpu.memory_space<vmem>>, %arg7: memref<128x128xbf16, #tpu.memory_space<vmem>>, %arg8: memref<1x8x16x8xbf16, #tpu.memory_space<vmem>>, %arg9: memref<8x16x128xbf16, #tpu.memory_space<vmem>>) attributes {dimension_semantics = [#tpu.dimension_semantics<parallel>, #tpu.dimension_semantics<parallel>], iteration_bounds = array<i64: 2, 2>, scalar_prefetch = 0 : i64, scratch_operands = 1 : i64, tpu.core_type = #tpu.core_type<tc>, window_params = [{transform_indices = @transform_0, window_bounds = array<i64: 1, 8, 18, 128>}, {transform_indices = @transform_1, window_bounds = array<i64: 1, 1, 18, 128>}, {transform_indices = @transform_2, window_bounds = array<i64: 1, 1, 18, 128>}, {pipeline_mode = #tpu.pipeline_mode<synchronous>, transform_indices = @transform_3, window_bounds = array<i64: 9, 128>}, {pipeline_mode = #tpu.pipeline_mode<synchronous>, transform_indices = @transform_4, window_bounds = array<i64: 1, 128>}, {pipeline_mode = #tpu.pipeline_mode<synchronous>, transform_indices = @transform_5, window_bounds = array<i64: 128, 128>}, {transform_indices = @transform_6, window_bounds = array<i64: 1, 8, 16, 8>}]} {
    %c0 = arith.constant 0 : index
    %c0_0 = arith.constant 0 : index
    %c0_1 = arith.constant 0 : index
    %c0_2 = arith.constant 0 : index
    %0 = vector.load %arg2[%c0, %c0_0, %c0_1, %c0_2] : memref<1x8x18x128xbf16, #tpu.memory_space<vmem>>, vector<1x8x18x128xbf16>
    %1 = vector.shape_cast %0 : vector<1x8x18x128xbf16> to vector<8x18x128xbf16>
    %c0_3 = arith.constant 0 : index
    %c0_4 = arith.constant 0 : index
    %2 = vector.load %arg5[%c0_3, %c0_4] : memref<9x128xbf16, #tpu.memory_space<vmem>>, vector<9x128xbf16>
    %3 = vector.extract_strided_slice %1 {offsets = [0, 0, 0], sizes = [8, 16, 128], strides = [1, 1, 1]} : vector<8x18x128xbf16> to vector<8x16x128xbf16>
    %4 = vector.extract_strided_slice %1 {offsets = [0, 1, 0], sizes = [8, 16, 128], strides = [1, 1, 1]} : vector<8x18x128xbf16> to vector<8x16x128xbf16>
    %5 = vector.extract_strided_slice %1 {offsets = [0, 2, 0], sizes = [8, 16, 128], strides = [1, 1, 1]} : vector<8x18x128xbf16> to vector<8x16x128xbf16>
    %c0_5 = arith.constant 0 : index
    %c0_6 = arith.constant 0 : index
    %c0_7 = arith.constant 0 : index
    %c0_8 = arith.constant 0 : index
    %6 = vector.load %arg3[%c0_5, %c0_6, %c0_7, %c0_8] : memref<1x1x18x128xbf16, #tpu.memory_space<vmem>>, vector<1x1x18x128xbf16>
    %7 = vector.shape_cast %6 : vector<1x1x18x128xbf16> to vector<1x18x128xbf16>
    %c0_9 = arith.constant 0 : index
    %c0_10 = arith.constant 0 : index
    %c0_11 = arith.constant 0 : index
    %c0_12 = arith.constant 0 : index
    %8 = vector.load %arg4[%c0_9, %c0_10, %c0_11, %c0_12] : memref<1x1x18x128xbf16, #tpu.memory_space<vmem>>, vector<1x1x18x128xbf16>
    %9 = vector.shape_cast %8 : vector<1x1x18x128xbf16> to vector<1x18x128xbf16>
    %10 = vector.extract_strided_slice %7 {offsets = [0, 0, 0], sizes = [1, 16, 128], strides = [1, 1, 1]} : vector<1x18x128xbf16> to vector<1x16x128xbf16>
    %11 = vector.extract_strided_slice %7 {offsets = [0, 1, 0], sizes = [1, 16, 128], strides = [1, 1, 1]} : vector<1x18x128xbf16> to vector<1x16x128xbf16>
    %12 = vector.extract_strided_slice %7 {offsets = [0, 2, 0], sizes = [1, 16, 128], strides = [1, 1, 1]} : vector<1x18x128xbf16> to vector<1x16x128xbf16>
    %13 = vector.extract_strided_slice %9 {offsets = [0, 0, 0], sizes = [1, 16, 128], strides = [1, 1, 1]} : vector<1x18x128xbf16> to vector<1x16x128xbf16>
    %14 = vector.extract_strided_slice %9 {offsets = [0, 1, 0], sizes = [1, 16, 128], strides = [1, 1, 1]} : vector<1x18x128xbf16> to vector<1x16x128xbf16>
    %15 = vector.extract_strided_slice %9 {offsets = [0, 2, 0], sizes = [1, 16, 128], strides = [1, 1, 1]} : vector<1x18x128xbf16> to vector<1x16x128xbf16>
    %16 = vector.extract_strided_slice %2 {offsets = [0, 0], sizes = [1, 128], strides = [1, 1]} : vector<9x128xbf16> to vector<1x128xbf16>
    %17 = vector.shape_cast %16 : vector<1x128xbf16> to vector<128xbf16>
    %18 = vector.shape_cast %17 : vector<128xbf16> to vector<1x1x128xbf16>
    %19 = vector.broadcast %18 : vector<1x1x128xbf16> to vector<8x16x128xbf16>
    %20 = arith.mulf %3, %19 : vector<8x16x128xbf16>
    %21 = vector.extract_strided_slice %2 {offsets = [1, 0], sizes = [1, 128], strides = [1, 1]} : vector<9x128xbf16> to vector<1x128xbf16>
    %22 = vector.shape_cast %21 : vector<1x128xbf16> to vector<128xbf16>
    %23 = vector.shape_cast %22 : vector<128xbf16> to vector<1x1x128xbf16>
    %24 = vector.broadcast %23 : vector<1x1x128xbf16> to vector<8x16x128xbf16>
    %25 = arith.mulf %4, %24 : vector<8x16x128xbf16>
    %26 = arith.addf %20, %25 : vector<8x16x128xbf16>
    %27 = vector.extract_strided_slice %2 {offsets = [2, 0], sizes = [1, 128], strides = [1, 1]} : vector<9x128xbf16> to vector<1x128xbf16>
    %28 = vector.shape_cast %27 : vector<1x128xbf16> to vector<128xbf16>
    %29 = vector.shape_cast %28 : vector<128xbf16> to vector<1x1x128xbf16>
    %30 = vector.broadcast %29 : vector<1x1x128xbf16> to vector<8x16x128xbf16>
    %31 = arith.mulf %5, %30 : vector<8x16x128xbf16>
    %32 = arith.addf %26, %31 : vector<8x16x128xbf16>
    %c0_13 = arith.constant 0 : index
    %c0_14 = arith.constant 0 : index
    %c0_15 = arith.constant 0 : index
    %33 = vector.load %arg9[%c0_13, %c0_14, %c0_15] : memref<8x16x128xbf16, #tpu.memory_space<vmem>>, vector<8x16x128xbf16>
    tpu.vector_store %arg9[%c0_13, %c0_14, %c0_15], %32 {strides = array<i32>} : memref<8x16x128xbf16, #tpu.memory_space<vmem>>, vector<8x16x128xbf16>,
    %c0_16 = arith.constant 0 : index
    %c0_17 = arith.constant 0 : index
    %c0_18 = arith.constant 0 : index
    %34 = vector.load %arg9[%c0_16, %c0_17, %c0_18] : memref<8x16x128xbf16, #tpu.memory_space<vmem>>, vector<7x16x128xbf16>
    %35 = vector.extract_strided_slice %3 {offsets = [1, 0, 0], sizes = [7, 16, 128], strides = [1, 1, 1]} : vector<8x16x128xbf16> to vector<7x16x128xbf16>
    %36 = vector.extract_strided_slice %2 {offsets = [3, 0], sizes = [1, 128], strides = [1, 1]} : vector<9x128xbf16> to vector<1x128xbf16>
    %37 = vector.shape_cast %36 : vector<1x128xbf16> to vector<128xbf16>
    %38 = vector.shape_cast %37 : vector<128xbf16> to vector<1x1x128xbf16>
    %39 = vector.broadcast %38 : vector<1x1x128xbf16> to vector<7x16x128xbf16>
    %40 = arith.mulf %35, %39 : vector<7x16x128xbf16>
    %41 = vector.extract_strided_slice %4 {offsets = [1, 0, 0], sizes = [7, 16, 128], strides = [1, 1, 1]} : vector<8x16x128xbf16> to vector<7x16x128xbf16>
    %42 = vector.extract_strided_slice %2 {offsets = [4, 0], sizes = [1, 128], strides = [1, 1]} : vector<9x128xbf16> to vector<1x128xbf16>
    %43 = vector.shape_cast %42 : vector<1x128xbf16> to vector<128xbf16>
    %44 = vector.shape_cast %43 : vector<128xbf16> to vector<1x1x128xbf16>
    %45 = vector.broadcast %44 : vector<1x1x128xbf16> to vector<7x16x128xbf16>
    %46 = arith.mulf %41, %45 : vector<7x16x128xbf16>
    %47 = arith.addf %40, %46 : vector<7x16x128xbf16>
    %48 = vector.extract_strided_slice %5 {offsets = [1, 0, 0], sizes = [7, 16, 128], strides = [1, 1, 1]} : vector<8x16x128xbf16> to vector<7x16x128xbf16>
    %49 = vector.extract_strided_slice %2 {offsets = [5, 0], sizes = [1, 128], strides = [1, 1]} : vector<9x128xbf16> to vector<1x128xbf16>
    %50 = vector.shape_cast %49 : vector<1x128xbf16> to vector<128xbf16>
    %51 = vector.shape_cast %50 : vector<128xbf16> to vector<1x1x128xbf16>
    %52 = vector.broadcast %51 : vector<1x1x128xbf16> to vector<7x16x128xbf16>
    %53 = arith.mulf %48, %52 : vector<7x16x128xbf16>
    %54 = arith.addf %47, %53 : vector<7x16x128xbf16>
    %55 = arith.addf %34, %54 : vector<7x16x128xbf16>
    %c0_19 = arith.constant 0 : index
    %c0_20 = arith.constant 0 : index
    %c0_21 = arith.constant 0 : index
    %56 = vector.load %arg9[%c0_19, %c0_20, %c0_21] : memref<8x16x128xbf16, #tpu.memory_space<vmem>>, vector<7x16x128xbf16>
    tpu.vector_store %arg9[%c0_19, %c0_20, %c0_21], %55 {strides = array<i32>} : memref<8x16x128xbf16, #tpu.memory_space<vmem>>, vector<7x16x128xbf16>,
    %c7 = arith.constant 7 : index
    %c0_22 = arith.constant 0 : index
    %c0_23 = arith.constant 0 : index
    %57 = vector.load %arg9[%c7, %c0_22, %c0_23] : memref<8x16x128xbf16, #tpu.memory_space<vmem>>, vector<1x16x128xbf16>
    %58 = vector.extract_strided_slice %2 {offsets = [3, 0], sizes = [1, 128], strides = [1, 1]} : vector<9x128xbf16> to vector<1x128xbf16>
    %59 = vector.shape_cast %58 : vector<1x128xbf16> to vector<128xbf16>
    %60 = vector.shape_cast %59 : vector<128xbf16> to vector<1x1x128xbf16>
    %61 = vector.broadcast %60 : vector<1x1x128xbf16> to vector<1x16x128xbf16>
    %62 = arith.mulf %10, %61 : vector<1x16x128xbf16>
    %63 = vector.extract_strided_slice %2 {offsets = [4, 0], sizes = [1, 128], strides = [1, 1]} : vector<9x128xbf16> to vector<1x128xbf16>
    %64 = vector.shape_cast %63 : vector<1x128xbf16> to vector<128xbf16>
    %65 = vector.shape_cast %64 : vector<128xbf16> to vector<1x1x128xbf16>
    %66 = vector.broadcast %65 : vector<1x1x128xbf16> to vector<1x16x128xbf16>
    %67 = arith.mulf %11, %66 : vector<1x16x128xbf16>
    %68 = arith.addf %62, %67 : vector<1x16x128xbf16>
    %69 = vector.extract_strided_slice %2 {offsets = [5, 0], sizes = [1, 128], strides = [1, 1]} : vector<9x128xbf16> to vector<1x128xbf16>
    %70 = vector.shape_cast %69 : vector<1x128xbf16> to vector<128xbf16>
    %71 = vector.shape_cast %70 : vector<128xbf16> to vector<1x1x128xbf16>
    %72 = vector.broadcast %71 : vector<1x1x128xbf16> to vector<1x16x128xbf16>
    %73 = arith.mulf %12, %72 : vector<1x16x128xbf16>
    %74 = arith.addf %68, %73 : vector<1x16x128xbf16>
    %75 = arith.addf %57, %74 : vector<1x16x128xbf16>
    %c7_24 = arith.constant 7 : index
    %c0_25 = arith.constant 0 : index
    %c0_26 = arith.constant 0 : index
    %76 = vector.load %arg9[%c7_24, %c0_25, %c0_26] : memref<8x16x128xbf16, #tpu.memory_space<vmem>>, vector<1x16x128xbf16>
    tpu.vector_store %arg9[%c7_24, %c0_25, %c0_26], %75 {strides = array<i32>} : memref<8x16x128xbf16, #tpu.memory_space<vmem>>, vector<1x16x128xbf16>,
    %c0_27 = arith.constant 0 : index
    %c0_28 = arith.constant 0 : index
    %c0_29 = arith.constant 0 : index
    %77 = vector.load %arg9[%c0_27, %c0_28, %c0_29] : memref<8x16x128xbf16, #tpu.memory_space<vmem>>, vector<6x16x128xbf16>
    %78 = vector.extract_strided_slice %3 {offsets = [2, 0, 0], sizes = [6, 16, 128], strides = [1, 1, 1]} : vector<8x16x128xbf16> to vector<6x16x128xbf16>
    %79 = vector.extract_strided_slice %2 {offsets = [6, 0], sizes = [1, 128], strides = [1, 1]} : vector<9x128xbf16> to vector<1x128xbf16>
    %80 = vector.shape_cast %79 : vector<1x128xbf16> to vector<128xbf16>
    %81 = vector.shape_cast %80 : vector<128xbf16> to vector<1x1x128xbf16>
    %82 = vector.broadcast %81 : vector<1x1x128xbf16> to vector<6x16x128xbf16>
    %83 = arith.mulf %78, %82 : vector<6x16x128xbf16>
    %84 = vector.extract_strided_slice %4 {offsets = [2, 0, 0], sizes = [6, 16, 128], strides = [1, 1, 1]} : vector<8x16x128xbf16> to vector<6x16x128xbf16>
    %85 = vector.extract_strided_slice %2 {offsets = [7, 0], sizes = [1, 128], strides = [1, 1]} : vector<9x128xbf16> to vector<1x128xbf16>
    %86 = vector.shape_cast %85 : vector<1x128xbf16> to vector<128xbf16>
    %87 = vector.shape_cast %86 : vector<128xbf16> to vector<1x1x128xbf16>
    %88 = vector.broadcast %87 : vector<1x1x128xbf16> to vector<6x16x128xbf16>
    %89 = arith.mulf %84, %88 : vector<6x16x128xbf16>
    %90 = arith.addf %83, %89 : vector<6x16x128xbf16>
    %91 = vector.extract_strided_slice %5 {offsets = [2, 0, 0], sizes = [6, 16, 128], strides = [1, 1, 1]} : vector<8x16x128xbf16> to vector<6x16x128xbf16>
    %92 = vector.extract_strided_slice %2 {offsets = [8, 0], sizes = [1, 128], strides = [1, 1]} : vector<9x128xbf16> to vector<1x128xbf16>
    %93 = vector.shape_cast %92 : vector<1x128xbf16> to vector<128xbf16>
    %94 = vector.shape_cast %93 : vector<128xbf16> to vector<1x1x128xbf16>
    %95 = vector.broadcast %94 : vector<1x1x128xbf16> to vector<6x16x128xbf16>
    %96 = arith.mulf %91, %95 : vector<6x16x128xbf16>
    %97 = arith.addf %90, %96 : vector<6x16x128xbf16>
    %98 = arith.addf %77, %97 : vector<6x16x128xbf16>
    %c0_30 = arith.constant 0 : index
    %c0_31 = arith.constant 0 : index
    %c0_32 = arith.constant 0 : index
    %99 = vector.load %arg9[%c0_30, %c0_31, %c0_32] : memref<8x16x128xbf16, #tpu.memory_space<vmem>>, vector<6x16x128xbf16>
    tpu.vector_store %arg9[%c0_30, %c0_31, %c0_32], %98 {strides = array<i32>} : memref<8x16x128xbf16, #tpu.memory_space<vmem>>, vector<6x16x128xbf16>,
    %c6 = arith.constant 6 : index
    %c0_33 = arith.constant 0 : index
    %c0_34 = arith.constant 0 : index
    %100 = vector.load %arg9[%c6, %c0_33, %c0_34] : memref<8x16x128xbf16, #tpu.memory_space<vmem>>, vector<1x16x128xbf16>
    %101 = vector.extract_strided_slice %2 {offsets = [6, 0], sizes = [1, 128], strides = [1, 1]} : vector<9x128xbf16> to vector<1x128xbf16>
    %102 = vector.shape_cast %101 : vector<1x128xbf16> to vector<128xbf16>
    %103 = vector.shape_cast %102 : vector<128xbf16> to vector<1x1x128xbf16>
    %104 = vector.broadcast %103 : vector<1x1x128xbf16> to vector<1x16x128xbf16>
    %105 = arith.mulf %10, %104 : vector<1x16x128xbf16>
    %106 = vector.extract_strided_slice %2 {offsets = [7, 0], sizes = [1, 128], strides = [1, 1]} : vector<9x128xbf16> to vector<1x128xbf16>
    %107 = vector.shape_cast %106 : vector<1x128xbf16> to vector<128xbf16>
    %108 = vector.shape_cast %107 : vector<128xbf16> to vector<1x1x128xbf16>
    %109 = vector.broadcast %108 : vector<1x1x128xbf16> to vector<1x16x128xbf16>
    %110 = arith.mulf %11, %109 : vector<1x16x128xbf16>
    %111 = arith.addf %105, %110 : vector<1x16x128xbf16>
    %112 = vector.extract_strided_slice %2 {offsets = [8, 0], sizes = [1, 128], strides = [1, 1]} : vector<9x128xbf16> to vector<1x128xbf16>
    %113 = vector.shape_cast %112 : vector<1x128xbf16> to vector<128xbf16>
    %114 = vector.shape_cast %113 : vector<128xbf16> to vector<1x1x128xbf16>
    %115 = vector.broadcast %114 : vector<1x1x128xbf16> to vector<1x16x128xbf16>
    %116 = arith.mulf %12, %115 : vector<1x16x128xbf16>
    %117 = arith.addf %111, %116 : vector<1x16x128xbf16>
    %118 = arith.addf %100, %117 : vector<1x16x128xbf16>
    %c6_35 = arith.constant 6 : index
    %c0_36 = arith.constant 0 : index
    %c0_37 = arith.constant 0 : index
    %119 = vector.load %arg9[%c6_35, %c0_36, %c0_37] : memref<8x16x128xbf16, #tpu.memory_space<vmem>>, vector<1x16x128xbf16>
    tpu.vector_store %arg9[%c6_35, %c0_36, %c0_37], %118 {strides = array<i32>} : memref<8x16x128xbf16, #tpu.memory_space<vmem>>, vector<1x16x128xbf16>,
    %c7_38 = arith.constant 7 : index
    %c0_39 = arith.constant 0 : index
    %c0_40 = arith.constant 0 : index
    %120 = vector.load %arg9[%c7_38, %c0_39, %c0_40] : memref<8x16x128xbf16, #tpu.memory_space<vmem>>, vector<1x16x128xbf16>
    %121 = vector.extract_strided_slice %2 {offsets = [6, 0], sizes = [1, 128], strides = [1, 1]} : vector<9x128xbf16> to vector<1x128xbf16>
    %122 = vector.shape_cast %121 : vector<1x128xbf16> to vector<128xbf16>
    %123 = vector.shape_cast %122 : vector<128xbf16> to vector<1x1x128xbf16>
    %124 = vector.broadcast %123 : vector<1x1x128xbf16> to vector<1x16x128xbf16>
    %125 = arith.mulf %13, %124 : vector<1x16x128xbf16>
    %126 = vector.extract_strided_slice %2 {offsets = [7, 0], sizes = [1, 128], strides = [1, 1]} : vector<9x128xbf16> to vector<1x128xbf16>
    %127 = vector.shape_cast %126 : vector<1x128xbf16> to vector<128xbf16>
    %128 = vector.shape_cast %127 : vector<128xbf16> to vector<1x1x128xbf16>
    %129 = vector.broadcast %128 : vector<1x1x128xbf16> to vector<1x16x128xbf16>
    %130 = arith.mulf %14, %129 : vector<1x16x128xbf16>
    %131 = arith.addf %125, %130 : vector<1x16x128xbf16>
    %132 = vector.extract_strided_slice %2 {offsets = [8, 0], sizes = [1, 128], strides = [1, 1]} : vector<9x128xbf16> to vector<1x128xbf16>
    %133 = vector.shape_cast %132 : vector<1x128xbf16> to vector<128xbf16>
    %134 = vector.shape_cast %133 : vector<128xbf16> to vector<1x1x128xbf16>
    %135 = vector.broadcast %134 : vector<1x1x128xbf16> to vector<1x16x128xbf16>
    %136 = arith.mulf %15, %135 : vector<1x16x128xbf16>
    %137 = arith.addf %131, %136 : vector<1x16x128xbf16>
    %138 = arith.addf %120, %137 : vector<1x16x128xbf16>
    %c7_41 = arith.constant 7 : index
    %c0_42 = arith.constant 0 : index
    %c0_43 = arith.constant 0 : index
    %139 = vector.load %arg9[%c7_41, %c0_42, %c0_43] : memref<8x16x128xbf16, #tpu.memory_space<vmem>>, vector<1x16x128xbf16>
    tpu.vector_store %arg9[%c7_41, %c0_42, %c0_43], %138 {strides = array<i32>} : memref<8x16x128xbf16, #tpu.memory_space<vmem>>, vector<1x16x128xbf16>,
    %c0_44 = arith.constant 0 : index
    %c0_45 = arith.constant 0 : index
    %c0_46 = arith.constant 0 : index
    %140 = vector.load %arg9[%c0_44, %c0_45, %c0_46] : memref<8x16x128xbf16, #tpu.memory_space<vmem>>, vector<8x16x128xbf16>
    %141 = vector.shape_cast %140 : vector<8x16x128xbf16> to vector<128x128xbf16>
    %c0_47 = arith.constant 0 : index
    %c0_48 = arith.constant 0 : index
    %142 = vector.load %arg7[%c0_47, %c0_48] : memref<128x128xbf16, #tpu.memory_space<vmem>>, vector<128x128xbf16>
    %cst = arith.constant dense<0.000000e+00> : vector<128x128xf32>
    %143 = tpu.matmul %141, %142, %cst {dimension_numbers = #tpu.dot_dimension_numbers<[1], [0], [0], [1], [0, 0, 1, 1], [], []>} : vector<128x128xbf16>, vector<128x128xbf16>, vector<128x128xf32> -> vector<128x128xf32>
    %c0_49 = arith.constant 0 : index
    %c0_50 = arith.constant 0 : index
    %144 = vector.load %arg6[%c0_49, %c0_50] : memref<1x128xf32, #tpu.memory_space<vmem>>, vector<1x128xf32>
    %145 = vector.broadcast %144 : vector<1x128xf32> to vector<128x128xf32>
    %146 = arith.addf %143, %145 : vector<128x128xf32>
    %147 = vector.extract_strided_slice %146 {offsets = [0, 0], sizes = [128, 8], strides = [1, 1]} : vector<128x128xf32> to vector<128x8xf32>
    %148 = vector.shape_cast %147 : vector<128x8xf32> to vector<8x16x8xf32>
    %149 = arith.truncf %148 : vector<8x16x8xf32> to vector<8x16x8xbf16>
    %c0_51 = arith.constant 0 : index
    %c0_52 = arith.constant 0 : index
    %c0_53 = arith.constant 0 : index
    %c0_54 = arith.constant 0 : index
    %150 = vector.load %arg8[%c0_51, %c0_52, %c0_53, %c0_54] : memref<1x8x16x8xbf16, #tpu.memory_space<vmem>>, vector<1x8x16x8xbf16>
    %151 = vector.shape_cast %150 : vector<1x8x16x8xbf16> to vector<8x16x8xbf16>
    %152 = vector.shape_cast %149 : vector<8x16x8xbf16> to vector<1x8x16x8xbf16>
    tpu.vector_store %arg8[%c0_51, %c0_52, %c0_53, %c0_54], %152 {strides = array<i32>} : memref<1x8x16x8xbf16, #tpu.memory_space<vmem>>, vector<1x8x16x8xbf16>,
    return
  }
  func.func @transform_0(%arg0: i32, %arg1: i32) -> (i32, i32, i32, i32) {
    %c0_i32 = arith.constant 0 : i32
    %c0_i32_0 = arith.constant 0 : i32
    %c0_i32_1 = arith.constant 0 : i32
    return %arg0, %arg1, %c0_i32, %c0_i32_0 : i32, i32, i32, i32
  }
  func.func @transform_1(%arg0: i32, %arg1: i32) -> (i32, i32, i32, i32) {
    %c8_i32 = arith.constant 8 : i32
    %0 = arith.muli %arg1, %c8_i32 : i32
    %c8_i32_0 = arith.constant 8 : i32
    %1 = arith.addi %0, %c8_i32_0 : i32
    %c0_i32 = arith.constant 0 : i32
    %c0_i32_1 = arith.constant 0 : i32
    %c0_i32_2 = arith.constant 0 : i32
    return %arg0, %1, %c0_i32, %c0_i32_1 : i32, i32, i32, i32
  }
  func.func @transform_2(%arg0: i32, %arg1: i32) -> (i32, i32, i32, i32) {
    %c8_i32 = arith.constant 8 : i32
    %0 = arith.muli %arg1, %c8_i32 : i32
    %c8_i32_0 = arith.constant 8 : i32
    %1 = arith.addi %0, %c8_i32_0 : i32
    %c1_i32 = arith.constant 1 : i32
    %2 = arith.addi %1, %c1_i32 : i32
    %c0_i32 = arith.constant 0 : i32
    %c0_i32_1 = arith.constant 0 : i32
    %c0_i32_2 = arith.constant 0 : i32
    return %arg0, %2, %c0_i32, %c0_i32_1 : i32, i32, i32, i32
  }
  func.func @transform_3(%arg0: i32, %arg1: i32) -> (i32, i32) {
    %c0_i32 = arith.constant 0 : i32
    %c0_i32_0 = arith.constant 0 : i32
    %c0_i32_1 = arith.constant 0 : i32
    return %c0_i32, %c0_i32_0 : i32, i32
  }
  func.func @transform_4(%arg0: i32, %arg1: i32) -> (i32, i32) {
    %c0_i32 = arith.constant 0 : i32
    %c0_i32_0 = arith.constant 0 : i32
    %c0_i32_1 = arith.constant 0 : i32
    return %c0_i32, %c0_i32_0 : i32, i32
  }
  func.func @transform_5(%arg0: i32, %arg1: i32) -> (i32, i32) {
    %c0_i32 = arith.constant 0 : i32
    %c0_i32_0 = arith.constant 0 : i32
    %c0_i32_1 = arith.constant 0 : i32
    return %c0_i32, %c0_i32_0 : i32, i32
  }
  func.func @transform_6(%arg0: i32, %arg1: i32) -> (i32, i32, i32, i32) {
    %c0_i32 = arith.constant 0 : i32
    %c0_i32_0 = arith.constant 0 : i32
    %c0_i32_1 = arith.constant 0 : i32
    return %arg0, %arg1, %c0_i32, %c0_i32_0 : i32, i32, i32, i32
  }
}

</mosaic_0001>

<llo_original>
// kernel: tpu_custom_call.1
$region0: #{tpu_custom_call.1}
  #allocation0 [shape = 'u32[]', space=smem, size = 0x4, offset = 0x4, fixed_abs, tag = 'smem constant byte address 0x4 - core index']
  #allocation1 [shape = 'u32[144,128]{1,0:T(1,128)}', space=vmem, size = 0x12000, scoped, tag = 'internal scratch']
  #allocation2 [shape = 'bf16[8,16,128]{2,1,0:T(8,128)(2,1)}', space=vmem, size = 0x8000, scoped, tag = 'scratch operand']
  %s0 = inlined_call_operand.vmem [shape: bf16[2,18,18,128], index: 0, kind: input, shape index: {}]
  %s1 = inlined_call_operand.vmem [shape: bf16[2,18,18,128], index: 1, kind: input, shape index: {}]
  %s2 = inlined_call_operand.vmem [shape: bf16[2,18,18,128], index: 2, kind: input, shape index: {}]
  %s3 = inlined_call_operand.vmem [shape: bf16[9,128], index: 3, kind: input, shape index: {}]
  %s4 = inlined_call_operand.vmem [shape: f32[1,128], index: 4, kind: input, shape index: {}]
  %s5 = inlined_call_operand.vmem [shape: bf16[128,128], index: 5, kind: input, shape index: {}]
  %s6 = inlined_call_operand.vmem [shape: bf16[2,16,16,8], index: 6, kind: output, shape index: {}]
  %s7 = sld [smem:[#allocation0]]
  $region57: #{tpu_custom_call.1} parent=0
    _
  %s9 = ssub.s32 1, %s7
  %s10 = scalar_select 0, %s9, %s7
  loop: start=0, step=1, limit=6
  $region2: #{tpu_custom_call.1} parent=0 // loop_pre_header
    _
  $region3: #{tpu_custom_call.1} parent=0 // loop_header
    %s12 = sphi 0, %s16
    %p13 = scmp.ge.s32.totalorder %s12, 6
    %s19 = sphi 0, %s31
    %s20 = sphi 0, %s27
    %s21 = sphi 0, %s19
    %s22 = sphi 0, %s20
    %s23 = sphi 0, %s21
    %s24 = sphi 0, %s22
    %s36 = sphi 0, %s38
    %s39 = sphi 0, %s36
    %s40 = sphi 0, %s39
    %s56 = sphi 0, %s40
    %s68 = sphi 0, %s70
    %s71 = sphi 0, %s68
    %s72 = sphi 0, %s71
    %s88 = sphi 0, %s72
    %s100 = sphi 0, %s102
    %s103 = sphi 0, %s100
    %s104 = sphi 0, %s103
    %s120 = sphi 0, %s104
    %s124 = sphi 0, %s124
    %s126 = sphi 0, %s124
    %s127 = sphi 0, %s126
    %s141 = sphi 0, %s127
    %s145 = sphi 0, %s145
    %s147 = sphi 0, %s145
    %s148 = sphi 0, %s147
    %s162 = sphi 0, %s148
    %s166 = sphi 0, %s166
    %s168 = sphi 0, %s166
    %s169 = sphi 0, %s168
    %s183 = sphi 0, %s169
    %s191 = sphi 0, %s193
    %s194 = sphi 0, %s191
    %s195 = sphi 0, %s194
    %s211 = sphi 0, %s195
  $region4: #{tpu_custom_call.1} parent=0 // loop_header_branch
    %15 = sbr.rel (%p13) target = $region8
  $region5: #{tpu_custom_call.1} parent=0 // loop_body
    %s17 = ssub.s32 %s12, 1
    %s18 = ssub.s32 %s12, 2
    %s25 = sadd.s32 1, %s20
    %p26 = scmp.ge.s32.totalorder %s25, 2
    %s27 = scalar_select %p26, 0, %s25
    %s28 = sadd.s32 1, %s19
    %s29 = scalar_select %p26, %s28, %s19
    %p30 = scmp.ge.s32.totalorder %s29, 2
    %s31 = scalar_select %p30, 0, %s29
    %s32 = ssub.s32 %s19, %s31
    %s33 = ssub.s32 %s20, %s27
    %s34 = sor.u32 %s32, %s33
    %p35 = scmp.eq.s32.totalorder %s34, 0
    %s37 = sadd.s32 %s36, 1
    %s38 = scalar_select %p35, %s36, %s37
    %p41 = pneg %p35
    %p42 = scmp.eq.s32.totalorder %s12, 3
    %p43 = por %p41, %p42
    %p44 = scmp.ne.s32.totalorder %s36, %s39
    %p45 = scmp.eq.s32.totalorder %s12, 0
    %p46 = por %p44, %p45
    %p47 = scmp.ne.s32.totalorder %s36, %s39
    %p48 = scmp.eq.s32.totalorder %s17, 3
    %p49 = por %p47, %p48
    %p50 = scmp.ne.s32.totalorder %s39, %s40
    %p51 = scmp.eq.s32.totalorder %s17, 0
    %p52 = por %p50, %p51
    %p53 = scmp.ne.s32.totalorder %s39, %s40
    %p54 = scmp.eq.s32.totalorder %s18, 3
    %p55 = por %p53, %p54
    %p57 = scmp.ne.s32.totalorder %s40, %s56
    %p58 = scmp.eq.s32.totalorder %s18, 0
    %p59 = por %p57, %p58
    %s60 = smul.u32 %s20, 8
    %s61 = sadd.s32 %s60, 8
    %s62 = smul.u32 %s27, 8
    %s63 = sadd.s32 %s62, 8
    %s64 = ssub.s32 %s19, %s31
    %s65 = ssub.s32 %s61, %s63
    %s66 = sor.u32 %s64, %s65
    %p67 = scmp.eq.s32.totalorder %s66, 0
    %s69 = sadd.s32 %s68, 1
    %s70 = scalar_select %p67, %s68, %s69
    %p73 = pneg %p67
    %p74 = scmp.eq.s32.totalorder %s12, 3
    %p75 = por %p73, %p74
    %p76 = scmp.ne.s32.totalorder %s68, %s71
    %p77 = scmp.eq.s32.totalorder %s12, 0
    %p78 = por %p76, %p77
    %p79 = scmp.ne.s32.totalorder %s68, %s71
    %p80 = scmp.eq.s32.totalorder %s17, 3
    %p81 = por %p79, %p80
    %p82 = scmp.ne.s32.totalorder %s71, %s72
    %p83 = scmp.eq.s32.totalorder %s17, 0
    %p84 = por %p82, %p83
    %p85 = scmp.ne.s32.totalorder %s71, %s72
    %p86 = scmp.eq.s32.totalorder %s18, 3
    %p87 = por %p85, %p86
    %p89 = scmp.ne.s32.totalorder %s72, %s88
    %p90 = scmp.eq.s32.totalorder %s18, 0
    %p91 = por %p89, %p90
    %s92 = smul.u32 %s20, 8
    %s93 = sadd.s32 %s92, 9
    %s94 = smul.u32 %s27, 8
    %s95 = sadd.s32 %s94, 9
    %s96 = ssub.s32 %s19, %s31
    %s97 = ssub.s32 %s93, %s95
    %s98 = sor.u32 %s96, %s97
    %p99 = scmp.eq.s32.totalorder %s98, 0
    %s101 = sadd.s32 %s100, 1
    %s102 = scalar_select %p99, %s100, %s101
    %p105 = pneg %p99
    %p106 = scmp.eq.s32.totalorder %s12, 3
    %p107 = por %p105, %p106
    %p108 = scmp.ne.s32.totalorder %s100, %s103
    %p109 = scmp.eq.s32.totalorder %s12, 0
    %p110 = por %p108, %p109
    %p111 = scmp.ne.s32.totalorder %s100, %s103
    %p112 = scmp.eq.s32.totalorder %s17, 3
    %p113 = por %p111, %p112
    %p114 = scmp.ne.s32.totalorder %s103, %s104
    %p115 = scmp.eq.s32.totalorder %s17, 0
    %p116 = por %p114, %p115
    %p117 = scmp.ne.s32.totalorder %s103, %s104
    %p118 = scmp.eq.s32.totalorder %s18, 3
    %p119 = por %p117, %p118
    %p121 = scmp.ne.s32.totalorder %s104, %s120
    %p122 = scmp.eq.s32.totalorder %s18, 0
    %p123 = por %p121, %p122
    %s125 = sadd.s32 %s124, 1
    %p128 = scmp.eq.s32.totalorder %s12, 3
    %p129 = scmp.ne.s32.totalorder %s124, %s126
    %p130 = scmp.eq.s32.totalorder %s12, 0
    %p131 = por %p129, %p130
    %p132 = scmp.ne.s32.totalorder %s124, %s126
    %p133 = scmp.eq.s32.totalorder %s17, 3
    %p134 = por %p132, %p133
    %p135 = scmp.ne.s32.totalorder %s126, %s127
    %p136 = scmp.eq.s32.totalorder %s17, 0
    %p137 = por %p135, %p136
    %p138 = scmp.ne.s32.totalorder %s126, %s127
    %p139 = scmp.eq.s32.totalorder %s18, 3
    %p140 = por %p138, %p139
    %p142 = scmp.ne.s32.totalorder %s127, %s141
    %p143 = scmp.eq.s32.totalorder %s18, 0
    %p144 = por %p142, %p143
    %s146 = sadd.s32 %s145, 1
    %p149 = scmp.eq.s32.totalorder %s12, 3
    %p150 = scmp.ne.s32.totalorder %s145, %s147
    %p151 = scmp.eq.s32.totalorder %s12, 0
    %p152 = por %p150, %p151
    %p153 = scmp.ne.s32.totalorder %s145, %s147
    %p154 = scmp.eq.s32.totalorder %s17, 3
    %p155 = por %p153, %p154
    %p156 = scmp.ne.s32.totalorder %s147, %s148
    %p157 = scmp.eq.s32.totalorder %s17, 0
    %p158 = por %p156, %p157
    %p159 = scmp.ne.s32.totalorder %s147, %s148
    %p160 = scmp.eq.s32.totalorder %s18, 3
    %p161 = por %p159, %p160
    %p163 = scmp.ne.s32.totalorder %s148, %s162
    %p164 = scmp.eq.s32.totalorder %s18, 0
    %p165 = por %p163, %p164
    %s167 = sadd.s32 %s166, 1
    %p170 = scmp.eq.s32.totalorder %s12, 3
    %p171 = scmp.ne.s32.totalorder %s166, %s168
    %p172 = scmp.eq.s32.totalorder %s12, 0
    %p173 = por %p171, %p172
    %p174 = scmp.ne.s32.totalorder %s166, %s168
    %p175 = scmp.eq.s32.totalorder %s17, 3
    %p176 = por %p174, %p175
    %p177 = scmp.ne.s32.totalorder %s168, %s169
    %p178 = scmp.eq.s32.totalorder %s17, 0
    %p179 = por %p177, %p178
    %p180 = scmp.ne.s32.totalorder %s168, %s169
    %p181 = scmp.eq.s32.totalorder %s18, 3
    %p182 = por %p180, %p181
    %p184 = scmp.ne.s32.totalorder %s169, %s183
    %p185 = scmp.eq.s32.totalorder %s18, 0
    %p186 = por %p184, %p185
    %s187 = ssub.s32 %s19, %s31
    %s188 = ssub.s32 %s20, %s27
    %s189 = sor.u32 %s187, %s188
    %p190 = scmp.eq.s32.totalorder %s189, 0
    %s192 = sadd.s32 %s191, 1
    %s193 = scalar_select %p190, %s191, %s192
    %p196 = pneg %p190
    %p197 = scmp.eq.s32.totalorder %s12, 3
    %p198 = por %p196, %p197
    %p199 = scmp.ne.s32.totalorder %s191, %s194
    %p200 = scmp.eq.s32.totalorder %s12, 0
    %p201 = por %p199, %p200
    %p202 = scmp.ne.s32.totalorder %s191, %s194
    %p203 = scmp.eq.s32.totalorder %s17, 3
    %p204 = por %p202, %p203
    %p205 = scmp.ne.s32.totalorder %s194, %s195
    %p206 = scmp.eq.s32.totalorder %s17, 0
    %p207 = por %p205, %p206
    %p208 = scmp.ne.s32.totalorder %s194, %s195
    %p209 = scmp.eq.s32.totalorder %s18, 3
    %p210 = por %p208, %p209
    %p212 = scmp.ne.s32.totalorder %s195, %s211
    %p213 = scmp.eq.s32.totalorder %s18, 0
    %p214 = por %p212, %p213
    %p215 = scmp.le.s32.totalorder 1, %s12
    %p216 = scmp.lt.s32.totalorder %s12, 5
    %p217 = pnand %p215, %p216
    %p218 = pneg %p217
    // Predicated region
    $region9: #{tpu_custom_call.1} parent=5 // pred_check
      _
    $region10: #{tpu_custom_call.1} parent=5 // pred_check_branch
      %220 = sbr.rel (%p217) target = $region12
    $region11: #{tpu_custom_call.1} parent=5 // pred_region
      %s221 = ssub.s32 %s12, 1
      // Predicated region
      $region13: #{tpu_custom_call.1} parent=11 // pred_check
        %p222 = pneg %p137
      $region14: #{tpu_custom_call.1} parent=11 // pred_check_branch
        %224 = sbr.rel (%p222) target = $region16
      $region15: #{tpu_custom_call.1} parent=11 // pred_region
        _
      $region16: #{tpu_custom_call.1} parent=11 // pred_fallthru
        _
      // Predicated region
      $region17: #{tpu_custom_call.1} parent=11 // pred_check
        %p225 = pneg %p158
      $region18: #{tpu_custom_call.1} parent=11 // pred_check_branch
        %227 = sbr.rel (%p225) target = $region20
      $region19: #{tpu_custom_call.1} parent=11 // pred_region
        _
      $region20: #{tpu_custom_call.1} parent=11 // pred_fallthru
        _
      // Predicated region
      $region21: #{tpu_custom_call.1} parent=11 // pred_check
        %p228 = pneg %p179
      $region22: #{tpu_custom_call.1} parent=11 // pred_check_branch
        %230 = sbr.rel (%p228) target = $region24
      $region23: #{tpu_custom_call.1} parent=11 // pred_region
        _
      $region24: #{tpu_custom_call.1} parent=11 // pred_fallthru
        _
    $region12: #{tpu_custom_call.1} parent=5 // pred_fallthru
      _
    %p231 = scmp.lt.s32.totalorder %s12, 4
    // Predicated region
    $region25: #{tpu_custom_call.1} parent=5 // pred_check
      %p232 = pneg %p231
    $region26: #{tpu_custom_call.1} parent=5 // pred_check_branch
      %234 = sbr.rel (%p232) target = $region28
    $region27: #{tpu_custom_call.1} parent=5 // pred_region
      // Predicated region
      $region29: #{tpu_custom_call.1} parent=27 // pred_check
        %p235 = pneg %p46
      $region30: #{tpu_custom_call.1} parent=27 // pred_check_branch
        %237 = sbr.rel (%p235) target = $region32
      $region31: #{tpu_custom_call.1} parent=27 // pred_region
        %s238 = smul.u32 8, %s20
        %s239 = ssub.s32 18, %s238
        %p240 = scmp.lt.s32.totalorder %s239, 8
        %s241 = scalar_select %p240, %s239, 8
        %s242 = smul.u32 64, %s241
        %s243 = smul.u32 %s242, 3
        %p244 = scmp.lt.s32.totalorder %s19, 1
        %s245 = scalar_select %p244, %s19, 1
        %p246 = scmp.lt.s32.totalorder %s238, 17
        %s247 = scalar_select %p246, %s238, 17
        %s248 = smul.addr %s247, 3
        %s249 = smul.addr %s245, 54
        %s250 = sadd.s32 %s248, %s249
        %s251 = smul.addr %s250, 4
        %s252 = scalar_lea.vmem %s0, %s251
        %s253 = smul.u32 8, %s20
        %s254 = ssub.s32 18, %s253
        %p255 = scmp.lt.s32.totalorder %s254, 8
        %s256 = scalar_select %p255, %s254, 8
        %s257 = smul.u32 64, %s256
        %s258 = smul.u32 %s257, 3
      $region32: #{tpu_custom_call.1} parent=27 // pred_fallthru
        _
      // Predicated region
      $region33: #{tpu_custom_call.1} parent=27 // pred_check
        %p259 = pneg %p78
      $region34: #{tpu_custom_call.1} parent=27 // pred_check_branch
        %261 = sbr.rel (%p259) target = $region36
      $region35: #{tpu_custom_call.1} parent=27 // pred_region
        %s262 = smul.u32 %s20, 8
        %s263 = sadd.s32 %s262, 8
        %p264 = scmp.lt.s32.totalorder %s19, 1
        %s265 = scalar_select %p264, %s19, 1
        %p266 = scmp.lt.s32.totalorder %s263, 17
        %s267 = scalar_select %p266, %s263, 17
        %s268 = smul.addr %s267, 3
        %s269 = smul.addr %s265, 54
        %s270 = sadd.s32 %s268, %s269
        %s271 = smul.addr %s270, 4
        %s272 = scalar_lea.vmem %s1, %s271
        %s273 = smul.u32 %s20, 8
        %s274 = sadd.s32 %s273, 8
      $region36: #{tpu_custom_call.1} parent=27 // pred_fallthru
        _
      // Predicated region
      $region37: #{tpu_custom_call.1} parent=27 // pred_check
        %p275 = pneg %p110
      $region38: #{tpu_custom_call.1} parent=27 // pred_check_branch
        %277 = sbr.rel (%p275) target = $region40
      $region39: #{tpu_custom_call.1} parent=27 // pred_region
        %s278 = smul.u32 %s20, 8
        %s279 = sadd.s32 %s278, 9
        %p280 = scmp.lt.s32.totalorder %s19, 1
        %s281 = scalar_select %p280, %s19, 1
        %p282 = scmp.lt.s32.totalorder %s279, 17
        %s283 = scalar_select %p282, %s279, 17
        %s284 = smul.addr %s283, 3
        %s285 = smul.addr %s281, 54
        %s286 = sadd.s32 %s284, %s285
        %s287 = smul.addr %s286, 4
        %s288 = scalar_lea.vmem %s2, %s287
        %s289 = smul.u32 %s20, 8
        %s290 = sadd.s32 %s289, 9
      $region40: #{tpu_custom_call.1} parent=27 // pred_fallthru
        _
    $region28: #{tpu_custom_call.1} parent=5 // pred_fallthru
      _
    %p291 = scmp.le.s32.totalorder 1, %s12
    %p292 = scmp.lt.s32.totalorder %s12, 5
    %p293 = pnand %p291, %p292
    %p294 = pneg %p293
    // Predicated region
    $region41: #{tpu_custom_call.1} parent=5 // pred_check
      _
    $region42: #{tpu_custom_call.1} parent=5 // pred_check_branch
      %296 = sbr.rel (%p293) target = $region44
    $region43: #{tpu_custom_call.1} parent=5 // pred_region
      %s297 = ssub.s32 %s12, 1
      %s298 = smul.u32 8, %s22
      %s299 = ssub.s32 18, %s298
      %p300 = scmp.lt.s32.totalorder %s299, 8
      %s301 = scalar_select %p300, %s299, 8
      %s302 = smul.u32 64, %s301
      %s303 = smul.u32 %s302, 3
      %p304 = scmp.lt.s32.totalorder %s21, 1
      %s305 = scalar_select %p304, %s21, 1
      %p306 = scmp.lt.s32.totalorder %s298, 17
      %s307 = scalar_select %p306, %s298, 17
      %s308 = smul.addr %s307, 3
      %s309 = smul.addr %s305, 54
      %s310 = sadd.s32 %s308, %s309
      %s311 = smul.addr %s310, 4
      %s312 = scalar_lea.vmem %s0, %s311
      %p313 = pneg %p52
      %p314 = pneg %p49
      %s315 = smul.u32 %s22, 8
      %s316 = sadd.s32 %s315, 8
      %p317 = scmp.lt.s32.totalorder %s21, 1
      %s318 = scalar_select %p317, %s21, 1
      %p319 = scmp.lt.s32.totalorder %s316, 17
      %s320 = scalar_select %p319, %s316, 17
      %s321 = smul.addr %s320, 3
      %s322 = smul.addr %s318, 54
      %s323 = sadd.s32 %s321, %s322
      %s324 = smul.addr %s323, 4
      %s325 = scalar_lea.vmem %s1, %s324
      %p326 = pneg %p84
      %p327 = pneg %p81
      %s328 = smul.u32 %s22, 8
      %s329 = sadd.s32 %s328, 9
      %p330 = scmp.lt.s32.totalorder %s21, 1
      %s331 = scalar_select %p330, %s21, 1
      %p332 = scmp.lt.s32.totalorder %s329, 17
      %s333 = scalar_select %p332, %s329, 17
      %s334 = smul.addr %s333, 3
      %s335 = smul.addr %s331, 54
      %s336 = sadd.s32 %s334, %s335
      %s337 = smul.addr %s336, 4
      %s338 = scalar_lea.vmem %s2, %s337
      %p339 = pneg %p116
      %p340 = pneg %p113
      %p341 = pneg %p137
      %p342 = pneg %p134
      %p343 = pneg %p158
      %p344 = pneg %p155
      %p345 = pneg %p179
      %p346 = pneg %p176
      %p347 = pneg %p207
      %p348 = pneg %p204
      %s349 = smul.u32 8, %s22
      %p350 = scmp.lt.s32.totalorder %s21, 1
      %s351 = scalar_select %p350, %s21, 1
      %p352 = scmp.lt.s32.totalorder %s349, 15
      %s353 = scalar_select %p352, %s349, 15
      %s354 = smul.addr %s353, 2
      %s355 = smul.addr %s351, 32
      %s356 = sadd.s32 %s354, %s355
      %s357 = smul.addr %s356, 4
      %s358 = scalar_lea.vmem %s6, %s357
      %s359 = smul.u32 8, %s22
      %s360 = ssub.s32 18, %s359
      %p361 = scmp.lt.s32.totalorder %s360, 8
      %s362 = scalar_select %p361, %s360, 8
      %s363 = smul.u32 64, %s362
      %s364 = smul.u32 %s363, 3
      %p365 = scmp.lt.s32.totalorder %s21, 1
      %s366 = scalar_select %p365, %s21, 1
      %p367 = scmp.lt.s32.totalorder %s359, 17
      %s368 = scalar_select %p367, %s359, 17
      %s369 = smul.addr %s368, 3
      %s370 = smul.addr %s366, 54
      %s371 = sadd.s32 %s369, %s370
      %s372 = smul.addr %s371, 4
      %s373 = scalar_lea.vmem %s0, %s372
      %s374 = smul.u32 8, %s22
      %s375 = ssub.s32 18, %s374
      %p376 = scmp.lt.s32.totalorder %s375, 8
      %s377 = scalar_select %p376, %s375, 8
      %s378 = smul.u32 64, %s377
      %s379 = smul.u32 %s378, 3
      %s380 = smul.u32 %s22, 8
      %s381 = sadd.s32 %s380, 8
      %p382 = scmp.lt.s32.totalorder %s21, 1
      %s383 = scalar_select %p382, %s21, 1
      %p384 = scmp.lt.s32.totalorder %s381, 17
      %s385 = scalar_select %p384, %s381, 17
      %s386 = smul.addr %s385, 3
      %s387 = smul.addr %s383, 54
      %s388 = sadd.s32 %s386, %s387
      %s389 = smul.addr %s388, 4
      %s390 = scalar_lea.vmem %s1, %s389
      %s391 = smul.u32 %s22, 8
      %s392 = sadd.s32 %s391, 8
      %s393 = smul.u32 %s22, 8
      %s394 = sadd.s32 %s393, 9
      %p395 = scmp.lt.s32.totalorder %s21, 1
      %s396 = scalar_select %p395, %s21, 1
      %p397 = scmp.lt.s32.totalorder %s394, 17
      %s398 = scalar_select %p397, %s394, 17
      %s399 = smul.addr %s398, 3
      %s400 = smul.addr %s396, 54
      %s401 = sadd.s32 %s399, %s400
      %s402 = smul.addr %s401, 4
      %s403 = scalar_lea.vmem %s2, %s402
      %s404 = smul.u32 %s22, 8
      %s405 = sadd.s32 %s404, 9
      %s406 = smul.u32 8, %s22
      %p407 = scmp.lt.s32.totalorder %s21, 1
      %s408 = scalar_select %p407, %s21, 1
      %p409 = scmp.lt.s32.totalorder %s406, 15
      %s410 = scalar_select %p409, %s406, 15
      %s411 = smul.addr %s410, 2
      %s412 = smul.addr %s408, 32
      %s413 = sadd.s32 %s411, %s412
      %s414 = smul.addr %s413, 4
      %s415 = scalar_lea.vmem %s6, %s414
      %s416 = smul.u32 8, %s22
      %v418 = vld [vmem:[%s373] sm:$0xf]
      %v419 = vld [vmem:[%s373 + $0x4] sm:$0xf]
      %v420 = vld [vmem:[%s373 + $0x8] sm:$0x1]
      %v421 = vld [vmem:[%s373 + $0xc] sm:$0xf]
      %v422 = vld [vmem:[%s373 + $0x10] sm:$0xf]
      %v423 = vld [vmem:[%s373 + $0x14] sm:$0x1]
      %v424 = vld [vmem:[%s373 + $0x18] sm:$0xf]
      %v425 = vld [vmem:[%s373 + $0x1c] sm:$0xf]
      %v426 = vld [vmem:[%s373 + $0x20] sm:$0x1]
      %v427 = vld [vmem:[%s373 + $0x24] sm:$0xf]
      %v428 = vld [vmem:[%s373 + $0x28] sm:$0xf]
      %v429 = vld [vmem:[%s373 + $0x2c] sm:$0x1]
      %v430 = vld [vmem:[%s373 + $0x30] sm:$0xf]
      %v431 = vld [vmem:[%s373 + $0x34] sm:$0xf]
      %v432 = vld [vmem:[%s373 + $0x38] sm:$0x1]
      %v433 = vld [vmem:[%s373 + $0x3c] sm:$0xf]
      %v434 = vld [vmem:[%s373 + $0x40] sm:$0xf]
      %v435 = vld [vmem:[%s373 + $0x44] sm:$0x1]
      %v436 = vld [vmem:[%s373 + $0x48] sm:$0xf]
      %v437 = vld [vmem:[%s373 + $0x4c] sm:$0xf]
      %v438 = vld [vmem:[%s373 + $0x50] sm:$0x1]
      %v439 = vld [vmem:[%s373 + $0x54] sm:$0xf]
      %v440 = vld [vmem:[%s373 + $0x58] sm:$0xf]
      %v441 = vld [vmem:[%s373 + $0x5c] sm:$0x1]
      %v442 = vld [vmem:[%s3] sm:$0xf]
      %v443 = vld [vmem:[%s3 + $0x4] sm:$0x1]
      %v444 = vld [vmem:[%s390] sm:$0xf]
      %v445 = vld [vmem:[%s390 + $0x4] sm:$0xf]
      %v446 = vld [vmem:[%s390 + $0x8] sm:$0x1]
      %v447 = vld [vmem:[%s403] sm:$0xf]
      %v448 = vld [vmem:[%s403 + $0x4] sm:$0xf]
      %v449 = vld [vmem:[%s403 + $0x8] sm:$0x1]
      %v451 = vpack.i.b16 %v442, %v442
      %v453 = vlaneseq
      %v454 = vshrl.u32 %v453, 7
      %v455 = vsub.s32 0, %v454
      %v456 = vrot.slane %v451, %v455
      %v458 = vunpack.c.l.b16 %v456
      %v459 = vpack.c.b16 %v458, %v458
      %v461 = vmul.bf16 %v418, %v459
      %v462 = vmul.bf16 %v419, %v459
      %v463 = vmul.bf16 %v421, %v459
      %v464 = vmul.bf16 %v422, %v459
      %v465 = vmul.bf16 %v424, %v459
      %v466 = vmul.bf16 %v425, %v459
      %v467 = vmul.bf16 %v427, %v459
      %v468 = vmul.bf16 %v428, %v459
      %v469 = vmul.bf16 %v430, %v459
      %v470 = vmul.bf16 %v431, %v459
      %v471 = vmul.bf16 %v433, %v459
      %v472 = vmul.bf16 %v434, %v459
      %v473 = vmul.bf16 %v436, %v459
      %v474 = vmul.bf16 %v437, %v459
      %v475 = vmul.bf16 %v439, %v459
      %v476 = vmul.bf16 %v440, %v459
      %v477 = vshrl.u32 %v442, 16
      %v478 = vpack.i.b16 %v477, %v477
      %v480 = vlaneseq
      %v481 = vshrl.u32 %v480, 7
      %v482 = vsub.s32 0, %v481
      %v483 = vrot.slane %v478, %v482
      %v485 = vunpack.c.l.b16 %v483
      %v486 = vpack.c.b16 %v485, %v485
      %v488 = vmul.bf16 %v418, %v486
      %v489 = vmul.bf16 %v419, %v486
      %v490 = vmul.bf16 %v420, %v486
      %v491 = vmul.bf16 %v421, %v486
      %v492 = vmul.bf16 %v422, %v486
      %v493 = vmul.bf16 %v423, %v486
      %v494 = vmul.bf16 %v424, %v486
      %v495 = vmul.bf16 %v425, %v486
      %v496 = vmul.bf16 %v426, %v486
      %v497 = vmul.bf16 %v427, %v486
      %v498 = vmul.bf16 %v428, %v486
      %v499 = vmul.bf16 %v429, %v486
      %v500 = vmul.bf16 %v430, %v486
      %v501 = vmul.bf16 %v431, %v486
      %v502 = vmul.bf16 %v432, %v486
      %v503 = vmul.bf16 %v433, %v486
      %v504 = vmul.bf16 %v434, %v486
      %v505 = vmul.bf16 %v435, %v486
      %v506 = vmul.bf16 %v436, %v486
      %v507 = vmul.bf16 %v437, %v486
      %v508 = vmul.bf16 %v438, %v486
      %v509 = vmul.bf16 %v439, %v486
      %v510 = vmul.bf16 %v440, %v486
      %v511 = vmul.bf16 %v441, %v486
      %vm512 = vsmask.f32 3328
      %vm513 = vsmask.f32 7440
      %vm514 = vmor %vm512, %vm513
      %v516 = vshrl.u32 %v488, 16
      %v518 = vrot.slane %v516, 4
      %v519 = vshll.u32 %v488, 16
      %v521 = vrot.slane %v519, 5
      %v522 = vor.u32 %v518, %v521
      %v523 = vrot.slane %v522, 4
      %v525 = vshll.u32 %v489, 16
      %v527 = vrot.slane %v525, 5
      %v528 = vsel %vm514, %v523, %v527
      %v529 = vshrl.u32 %v489, 16
      %v531 = vrot.slane %v529, 4
      %v532 = vor.u32 %v531, %v527
      %v533 = vrot.slane %v532, 4
      %v535 = vshll.u32 %v490, 16
      %v537 = vrot.slane %v535, 5
      %v538 = vsel %vm514, %v533, %v537
      %v540 = vshrl.u32 %v491, 16
      %v542 = vrot.slane %v540, 4
      %v543 = vshll.u32 %v491, 16
      %v545 = vrot.slane %v543, 5
      %v546 = vor.u32 %v542, %v545
      %v547 = vrot.slane %v546, 4
      %v549 = vshll.u32 %v492, 16
      %v551 = vrot.slane %v549, 5
      %v552 = vsel %vm514, %v547, %v551
      %v553 = vshrl.u32 %v492, 16
      %v555 = vrot.slane %v553, 4
      %v556 = vor.u32 %v555, %v551
      %v557 = vrot.slane %v556, 4
      %v559 = vshll.u32 %v493, 16
      %v561 = vrot.slane %v559, 5
      %v562 = vsel %vm514, %v557, %v561
      %v564 = vshrl.u32 %v494, 16
      %v566 = vrot.slane %v564, 4
      %v567 = vshll.u32 %v494, 16
      %v569 = vrot.slane %v567, 5
      %v570 = vor.u32 %v566, %v569
      %v571 = vrot.slane %v570, 4
      %v573 = vshll.u32 %v495, 16
      %v575 = vrot.slane %v573, 5
      %v576 = vsel %vm514, %v571, %v575
      %v577 = vshrl.u32 %v495, 16
      %v579 = vrot.slane %v577, 4
      %v580 = vor.u32 %v579, %v575
      %v581 = vrot.slane %v580, 4
      %v583 = vshll.u32 %v496, 16
      %v585 = vrot.slane %v583, 5
      %v586 = vsel %vm514, %v581, %v585
      %v588 = vshrl.u32 %v497, 16
      %v590 = vrot.slane %v588, 4
      %v591 = vshll.u32 %v497, 16
      %v593 = vrot.slane %v591, 5
      %v594 = vor.u32 %v590, %v593
      %v595 = vrot.slane %v594, 4
      %v597 = vshll.u32 %v498, 16
      %v599 = vrot.slane %v597, 5
      %v600 = vsel %vm514, %v595, %v599
      %v601 = vshrl.u32 %v498, 16
      %v603 = vrot.slane %v601, 4
      %v604 = vor.u32 %v603, %v599
      %v605 = vrot.slane %v604, 4
      %v607 = vshll.u32 %v499, 16
      %v609 = vrot.slane %v607, 5
      %v610 = vsel %vm514, %v605, %v609
      %v612 = vshrl.u32 %v500, 16
      %v614 = vrot.slane %v612, 4
      %v615 = vshll.u32 %v500, 16
      %v617 = vrot.slane %v615, 5
      %v618 = vor.u32 %v614, %v617
      %v619 = vrot.slane %v618, 4
      %v621 = vshll.u32 %v501, 16
      %v623 = vrot.slane %v621, 5
      %v624 = vsel %vm514, %v619, %v623
      %v625 = vshrl.u32 %v501, 16
      %v627 = vrot.slane %v625, 4
      %v628 = vor.u32 %v627, %v623
      %v629 = vrot.slane %v628, 4
      %v631 = vshll.u32 %v502, 16
      %v633 = vrot.slane %v631, 5
      %v634 = vsel %vm514, %v629, %v633
      %v636 = vshrl.u32 %v503, 16
      %v638 = vrot.slane %v636, 4
      %v639 = vshll.u32 %v503, 16
      %v641 = vrot.slane %v639, 5
      %v642 = vor.u32 %v638, %v641
      %v643 = vrot.slane %v642, 4
      %v645 = vshll.u32 %v504, 16
      %v647 = vrot.slane %v645, 5
      %v648 = vsel %vm514, %v643, %v647
      %v649 = vshrl.u32 %v504, 16
      %v651 = vrot.slane %v649, 4
      %v652 = vor.u32 %v651, %v647
      %v653 = vrot.slane %v652, 4
      %v655 = vshll.u32 %v505, 16
      %v657 = vrot.slane %v655, 5
      %v658 = vsel %vm514, %v653, %v657
      %v660 = vshrl.u32 %v506, 16
      %v662 = vrot.slane %v660, 4
      %v663 = vshll.u32 %v506, 16
      %v665 = vrot.slane %v663, 5
      %v666 = vor.u32 %v662, %v665
      %v667 = vrot.slane %v666, 4
      %v669 = vshll.u32 %v507, 16
      %v671 = vrot.slane %v669, 5
      %v672 = vsel %vm514, %v667, %v671
      %v673 = vshrl.u32 %v507, 16
      %v675 = vrot.slane %v673, 4
      %v676 = vor.u32 %v675, %v671
      %v677 = vrot.slane %v676, 4
      %v679 = vshll.u32 %v508, 16
      %v681 = vrot.slane %v679, 5
      %v682 = vsel %vm514, %v677, %v681
      %v684 = vshrl.u32 %v509, 16
      %v686 = vrot.slane %v684, 4
      %v687 = vshll.u32 %v509, 16
      %v689 = vrot.slane %v687, 5
      %v690 = vor.u32 %v686, %v689
      %v691 = vrot.slane %v690, 4
      %v693 = vshll.u32 %v510, 16
      %v695 = vrot.slane %v693, 5
      %v696 = vsel %vm514, %v691, %v695
      %v697 = vshrl.u32 %v510, 16
      %v699 = vrot.slane %v697, 4
      %v700 = vor.u32 %v699, %v695
      %v701 = vrot.slane %v700, 4
      %v703 = vshll.u32 %v511, 16
      %v705 = vrot.slane %v703, 5
      %v706 = vsel %vm514, %v701, %v705
      %v723 = vadd.bf16 %v461, %v528
      %v724 = vadd.bf16 %v462, %v538
      %v725 = vadd.bf16 %v463, %v552
      %v726 = vadd.bf16 %v464, %v562
      %v727 = vadd.bf16 %v465, %v576
      %v728 = vadd.bf16 %v466, %v586
      %v729 = vadd.bf16 %v467, %v600
      %v730 = vadd.bf16 %v468, %v610
      %v731 = vadd.bf16 %v469, %v624
      %v732 = vadd.bf16 %v470, %v634
      %v733 = vadd.bf16 %v471, %v648
      %v734 = vadd.bf16 %v472, %v658
      %v735 = vadd.bf16 %v473, %v672
      %v736 = vadd.bf16 %v474, %v682
      %v737 = vadd.bf16 %v475, %v696
      %v738 = vadd.bf16 %v476, %v706
      %v739 = vlaneseq
      %v740 = vshrl.u32 %v739, 7
      %v741 = vsub.s32 1, %v740
      %v742 = vrot.slane %v451, %v741
      %v744 = vunpack.c.l.b16 %v742
      %v745 = vpack.c.b16 %v744, %v744
      %v747 = vmul.bf16 %v418, %v745
      %v748 = vmul.bf16 %v419, %v745
      %v749 = vmul.bf16 %v420, %v745
      %v750 = vmul.bf16 %v421, %v745
      %v751 = vmul.bf16 %v422, %v745
      %v752 = vmul.bf16 %v423, %v745
      %v753 = vmul.bf16 %v424, %v745
      %v754 = vmul.bf16 %v425, %v745
      %v755 = vmul.bf16 %v426, %v745
      %v756 = vmul.bf16 %v427, %v745
      %v757 = vmul.bf16 %v428, %v745
      %v758 = vmul.bf16 %v429, %v745
      %v759 = vmul.bf16 %v430, %v745
      %v760 = vmul.bf16 %v431, %v745
      %v761 = vmul.bf16 %v432, %v745
      %v762 = vmul.bf16 %v433, %v745
      %v763 = vmul.bf16 %v434, %v745
      %v764 = vmul.bf16 %v435, %v745
      %v765 = vmul.bf16 %v436, %v745
      %v766 = vmul.bf16 %v437, %v745
      %v767 = vmul.bf16 %v438, %v745
      %v768 = vmul.bf16 %v439, %v745
      %v769 = vmul.bf16 %v440, %v745
      %v770 = vmul.bf16 %v441, %v745
      %vm795 = vcmask 1042432
      %vm796 = vcmask 1046532
      %vm797 = vmor %vm795, %vm796
      %v798 = vrot.slane %v747, 5
      %v799 = vrot.slane %v798, 4
      %v800 = vrot.slane %v748, 5
      %v801 = vsel %vm797, %v799, %v800
      %v802 = vrot.slane %v800, 4
      %v803 = vrot.slane %v749, 5
      %v804 = vsel %vm797, %v802, %v803
      %v805 = vrot.slane %v750, 5
      %v806 = vrot.slane %v805, 4
      %v807 = vrot.slane %v751, 5
      %v808 = vsel %vm797, %v806, %v807
      %v809 = vrot.slane %v807, 4
      %v810 = vrot.slane %v752, 5
      %v811 = vsel %vm797, %v809, %v810
      %v812 = vrot.slane %v753, 5
      %v813 = vrot.slane %v812, 4
      %v814 = vrot.slane %v754, 5
      %v815 = vsel %vm797, %v813, %v814
      %v816 = vrot.slane %v814, 4
      %v817 = vrot.slane %v755, 5
      %v818 = vsel %vm797, %v816, %v817
      %v819 = vrot.slane %v756, 5
      %v820 = vrot.slane %v819, 4
      %v821 = vrot.slane %v757, 5
      %v822 = vsel %vm797, %v820, %v821
      %v823 = vrot.slane %v821, 4
      %v824 = vrot.slane %v758, 5
      %v825 = vsel %vm797, %v823, %v824
      %v826 = vrot.slane %v759, 5
      %v827 = vrot.slane %v826, 4
      %v828 = vrot.slane %v760, 5
      %v829 = vsel %vm797, %v827, %v828
      %v830 = vrot.slane %v828, 4
      %v831 = vrot.slane %v761, 5
      %v832 = vsel %vm797, %v830, %v831
      %v833 = vrot.slane %v762, 5
      %v834 = vrot.slane %v833, 4
      %v835 = vrot.slane %v763, 5
      %v836 = vsel %vm797, %v834, %v835
      %v837 = vrot.slane %v835, 4
      %v838 = vrot.slane %v764, 5
      %v839 = vsel %vm797, %v837, %v838
      %v840 = vrot.slane %v765, 5
      %v841 = vrot.slane %v840, 4
      %v842 = vrot.slane %v766, 5
      %v843 = vsel %vm797, %v841, %v842
      %v844 = vrot.slane %v842, 4
      %v845 = vrot.slane %v767, 5
      %v846 = vsel %vm797, %v844, %v845
      %v847 = vrot.slane %v768, 5
      %v848 = vrot.slane %v847, 4
      %v849 = vrot.slane %v769, 5
      %v850 = vsel %vm797, %v848, %v849
      %v851 = vrot.slane %v849, 4
      %v852 = vrot.slane %v770, 5
      %v853 = vsel %vm797, %v851, %v852
      %v870 = vadd.bf16 %v723, %v801
      %v871 = vadd.bf16 %v724, %v804
      %v872 = vadd.bf16 %v725, %v808
      %v873 = vadd.bf16 %v726, %v811
      %v874 = vadd.bf16 %v727, %v815
      %v875 = vadd.bf16 %v728, %v818
      %v876 = vadd.bf16 %v729, %v822
      %v877 = vadd.bf16 %v730, %v825
      %v878 = vadd.bf16 %v731, %v829
      %v879 = vadd.bf16 %v732, %v832
      %v880 = vadd.bf16 %v733, %v836
      %v881 = vadd.bf16 %v734, %v839
      %v882 = vadd.bf16 %v735, %v843
      %v883 = vadd.bf16 %v736, %v846
      %v884 = vadd.bf16 %v737, %v850
      %v885 = vadd.bf16 %v738, %v853
      %886 = vst [vmem:[#allocation2] sm:$0xf] %v870
      %887 = vst [vmem:[#allocation2 + $0x4] sm:$0xf] %v871
      %888 = vst [vmem:[#allocation2 + $0x8] sm:$0xf] %v872
      %889 = vst [vmem:[#allocation2 + $0xc] sm:$0xf] %v873
      %890 = vst [vmem:[#allocation2 + $0x10] sm:$0xf] %v874
      %891 = vst [vmem:[#allocation2 + $0x14] sm:$0xf] %v875
      %892 = vst [vmem:[#allocation2 + $0x18] sm:$0xf] %v876
      %893 = vst [vmem:[#allocation2 + $0x1c] sm:$0xf] %v877
      %894 = vst [vmem:[#allocation2 + $0x20] sm:$0xf] %v878
      %895 = vst [vmem:[#allocation2 + $0x24] sm:$0xf] %v879
      %896 = vst [vmem:[#allocation2 + $0x28] sm:$0xf] %v880
      %897 = vst [vmem:[#allocation2 + $0x2c] sm:$0xf] %v881
      %898 = vst [vmem:[#allocation2 + $0x30] sm:$0xf] %v882
      %899 = vst [vmem:[#allocation2 + $0x34] sm:$0xf] %v883
      %900 = vst [vmem:[#allocation2 + $0x38] sm:$0xf] %v884
      %901 = vst [vmem:[#allocation2 + $0x3c] sm:$0xf] %v885
      %v902 = vld [vmem:[#allocation2] sm:$0xf]
      %v903 = vld [vmem:[#allocation2 + $0x4] sm:$0xf]
      %v904 = vld [vmem:[#allocation2 + $0x8] sm:$0xf]
      %v905 = vld [vmem:[#allocation2 + $0xc] sm:$0xf]
      %v906 = vld [vmem:[#allocation2 + $0x10] sm:$0xf]
      %v907 = vld [vmem:[#allocation2 + $0x14] sm:$0xf]
      %v908 = vld [vmem:[#allocation2 + $0x18] sm:$0xf]
      %v909 = vld [vmem:[#allocation2 + $0x1c] sm:$0xf]
      %v910 = vld [vmem:[#allocation2 + $0x20] sm:$0xf]
      %v911 = vld [vmem:[#allocation2 + $0x24] sm:$0xf]
      %v912 = vld [vmem:[#allocation2 + $0x28] sm:$0xf]
      %v913 = vld [vmem:[#allocation2 + $0x2c] sm:$0xf]
      %v914 = vld [vmem:[#allocation2 + $0x30] sm:$0xf]
      %v915 = vld [vmem:[#allocation2 + $0x34] sm:$0xf]
      %v916 = vlaneseq
      %v917 = vshrl.u32 %v916, 7
      %v918 = vsub.s32 1, %v917
      %v919 = vrot.slane %v478, %v918
      %v921 = vunpack.c.l.b16 %v919
      %v922 = vpack.c.b16 %v921, %v921
      %v924 = vmul.bf16 %v421, %v922
      %v925 = vmul.bf16 %v422, %v922
      %v926 = vmul.bf16 %v424, %v922
      %v927 = vmul.bf16 %v425, %v922
      %v928 = vmul.bf16 %v427, %v922
      %v929 = vmul.bf16 %v428, %v922
      %v930 = vmul.bf16 %v430, %v922
      %v931 = vmul.bf16 %v431, %v922
      %v932 = vmul.bf16 %v433, %v922
      %v933 = vmul.bf16 %v434, %v922
      %v934 = vmul.bf16 %v436, %v922
      %v935 = vmul.bf16 %v437, %v922
      %v936 = vmul.bf16 %v439, %v922
      %v937 = vmul.bf16 %v440, %v922
      %v938 = vlaneseq
      %v939 = vshrl.u32 %v938, 7
      %v940 = vsub.s32 2, %v939
      %v941 = vrot.slane %v451, %v940
      %v943 = vunpack.c.l.b16 %v941
      %v944 = vpack.c.b16 %v943, %v943
      %v946 = vmul.bf16 %v421, %v944
      %v947 = vmul.bf16 %v422, %v944
      %v948 = vmul.bf16 %v423, %v944
      %v949 = vmul.bf16 %v424, %v944
      %v950 = vmul.bf16 %v425, %v944
      %v951 = vmul.bf16 %v426, %v944
      %v952 = vmul.bf16 %v427, %v944
      %v953 = vmul.bf16 %v428, %v944
      %v954 = vmul.bf16 %v429, %v944
      %v955 = vmul.bf16 %v430, %v944
      %v956 = vmul.bf16 %v431, %v944
      %v957 = vmul.bf16 %v432, %v944
      %v958 = vmul.bf16 %v433, %v944
      %v959 = vmul.bf16 %v434, %v944
      %v960 = vmul.bf16 %v435, %v944
      %v961 = vmul.bf16 %v436, %v944
      %v962 = vmul.bf16 %v437, %v944
      %v963 = vmul.bf16 %v438, %v944
      %v964 = vmul.bf16 %v439, %v944
      %v965 = vmul.bf16 %v440, %v944
      %v966 = vmul.bf16 %v441, %v944
      %v968 = vshrl.u32 %v946, 16
      %v970 = vrot.slane %v968, 4
      %v971 = vshll.u32 %v946, 16
      %v973 = vrot.slane %v971, 5
      %v974 = vor.u32 %v970, %v973
      %v975 = vrot.slane %v974, 4
      %v977 = vshll.u32 %v947, 16
      %v979 = vrot.slane %v977, 5
      %v980 = vsel %vm514, %v975, %v979
      %v981 = vshrl.u32 %v947, 16
      %v983 = vrot.slane %v981, 4
      %v984 = vor.u32 %v983, %v979
      %v985 = vrot.slane %v984, 4
      %v987 = vshll.u32 %v948, 16
      %v989 = vrot.slane %v987, 5
      %v990 = vsel %vm514, %v985, %v989
      %v992 = vshrl.u32 %v949, 16
      %v994 = vrot.slane %v992, 4
      %v995 = vshll.u32 %v949, 16
      %v997 = vrot.slane %v995, 5
      %v998 = vor.u32 %v994, %v997
      %v999 = vrot.slane %v998, 4
      %v1001 = vshll.u32 %v950, 16
      %v1003 = vrot.slane %v1001, 5
      %v1004 = vsel %vm514, %v999, %v1003
      %v1005 = vshrl.u32 %v950, 16
      %v1007 = vrot.slane %v1005, 4
      %v1008 = vor.u32 %v1007, %v1003
      %v1009 = vrot.slane %v1008, 4
      %v1011 = vshll.u32 %v951, 16
      %v1013 = vrot.slane %v1011, 5
      %v1014 = vsel %vm514, %v1009, %v1013
      %v1016 = vshrl.u32 %v952, 16
      %v1018 = vrot.slane %v1016, 4
      %v1019 = vshll.u32 %v952, 16
      %v1021 = vrot.slane %v1019, 5
      %v1022 = vor.u32 %v1018, %v1021
      %v1023 = vrot.slane %v1022, 4
      %v1025 = vshll.u32 %v953, 16
      %v1027 = vrot.slane %v1025, 5
      %v1028 = vsel %vm514, %v1023, %v1027
      %v1029 = vshrl.u32 %v953, 16
      %v1031 = vrot.slane %v1029, 4
      %v1032 = vor.u32 %v1031, %v1027
      %v1033 = vrot.slane %v1032, 4
      %v1035 = vshll.u32 %v954, 16
      %v1037 = vrot.slane %v1035, 5
      %v1038 = vsel %vm514, %v1033, %v1037
      %v1040 = vshrl.u32 %v955, 16
      %v1042 = vrot.slane %v1040, 4
      %v1043 = vshll.u32 %v955, 16
      %v1045 = vrot.slane %v1043, 5
      %v1046 = vor.u32 %v1042, %v1045
      %v1047 = vrot.slane %v1046, 4
      %v1049 = vshll.u32 %v956, 16
      %v1051 = vrot.slane %v1049, 5
      %v1052 = vsel %vm514, %v1047, %v1051
      %v1053 = vshrl.u32 %v956, 16
      %v1055 = vrot.slane %v1053, 4
      %v1056 = vor.u32 %v1055, %v1051
      %v1057 = vrot.slane %v1056, 4
      %v1059 = vshll.u32 %v957, 16
      %v1061 = vrot.slane %v1059, 5
      %v1062 = vsel %vm514, %v1057, %v1061
      %v1064 = vshrl.u32 %v958, 16
      %v1066 = vrot.slane %v1064, 4
      %v1067 = vshll.u32 %v958, 16
      %v1069 = vrot.slane %v1067, 5
      %v1070 = vor.u32 %v1066, %v1069
      %v1071 = vrot.slane %v1070, 4
      %v1073 = vshll.u32 %v959, 16
      %v1075 = vrot.slane %v1073, 5
      %v1076 = vsel %vm514, %v1071, %v1075
      %v1077 = vshrl.u32 %v959, 16
      %v1079 = vrot.slane %v1077, 4
      %v1080 = vor.u32 %v1079, %v1075
      %v1081 = vrot.slane %v1080, 4
      %v1083 = vshll.u32 %v960, 16
      %v1085 = vrot.slane %v1083, 5
      %v1086 = vsel %vm514, %v1081, %v1085
      %v1088 = vshrl.u32 %v961, 16
      %v1090 = vrot.slane %v1088, 4
      %v1091 = vshll.u32 %v961, 16
      %v1093 = vrot.slane %v1091, 5
      %v1094 = vor.u32 %v1090, %v1093
      %v1095 = vrot.slane %v1094, 4
      %v1097 = vshll.u32 %v962, 16
      %v1099 = vrot.slane %v1097, 5
      %v1100 = vsel %vm514, %v1095, %v1099
      %v1101 = vshrl.u32 %v962, 16
      %v1103 = vrot.slane %v1101, 4
      %v1104 = vor.u32 %v1103, %v1099
      %v1105 = vrot.slane %v1104, 4
      %v1107 = vshll.u32 %v963, 16
      %v1109 = vrot.slane %v1107, 5
      %v1110 = vsel %vm514, %v1105, %v1109
      %v1112 = vshrl.u32 %v964, 16
      %v1114 = vrot.slane %v1112, 4
      %v1115 = vshll.u32 %v964, 16
      %v1117 = vrot.slane %v1115, 5
      %v1118 = vor.u32 %v1114, %v1117
      %v1119 = vrot.slane %v1118, 4
      %v1121 = vshll.u32 %v965, 16
      %v1123 = vrot.slane %v1121, 5
      %v1124 = vsel %vm514, %v1119, %v1123
      %v1125 = vshrl.u32 %v965, 16
      %v1127 = vrot.slane %v1125, 4
      %v1128 = vor.u32 %v1127, %v1123
      %v1129 = vrot.slane %v1128, 4
      %v1131 = vshll.u32 %v966, 16
      %v1133 = vrot.slane %v1131, 5
      %v1134 = vsel %vm514, %v1129, %v1133
      %v1149 = vadd.bf16 %v924, %v980
      %v1150 = vadd.bf16 %v925, %v990
      %v1151 = vadd.bf16 %v926, %v1004
      %v1152 = vadd.bf16 %v927, %v1014
      %v1153 = vadd.bf16 %v928, %v1028
      %v1154 = vadd.bf16 %v929, %v1038
      %v1155 = vadd.bf16 %v930, %v1052
      %v1156 = vadd.bf16 %v931, %v1062
      %v1157 = vadd.bf16 %v932, %v1076
      %v1158 = vadd.bf16 %v933, %v1086
      %v1159 = vadd.bf16 %v934, %v1100
      %v1160 = vadd.bf16 %v935, %v1110
      %v1161 = vadd.bf16 %v936, %v1124
      %v1162 = vadd.bf16 %v937, %v1134
      %v1163 = vlaneseq
      %v1164 = vshrl.u32 %v1163, 7
      %v1165 = vsub.s32 2, %v1164
      %v1166 = vrot.slane %v478, %v1165
      %v1168 = vunpack.c.l.b16 %v1166
      %v1169 = vpack.c.b16 %v1168, %v1168
      %v1171 = vmul.bf16 %v421, %v1169
      %v1172 = vmul.bf16 %v422, %v1169
      %v1173 = vmul.bf16 %v423, %v1169
      %v1174 = vmul.bf16 %v424, %v1169
      %v1175 = vmul.bf16 %v425, %v1169
      %v1176 = vmul.bf16 %v426, %v1169
      %v1177 = vmul.bf16 %v427, %v1169
      %v1178 = vmul.bf16 %v428, %v1169
      %v1179 = vmul.bf16 %v429, %v1169
      %v1180 = vmul.bf16 %v430, %v1169
      %v1181 = vmul.bf16 %v431, %v1169
      %v1182 = vmul.bf16 %v432, %v1169
      %v1183 = vmul.bf16 %v433, %v1169
      %v1184 = vmul.bf16 %v434, %v1169
      %v1185 = vmul.bf16 %v435, %v1169
      %v1186 = vmul.bf16 %v436, %v1169
      %v1187 = vmul.bf16 %v437, %v1169
      %v1188 = vmul.bf16 %v438, %v1169
      %v1189 = vmul.bf16 %v439, %v1169
      %v1190 = vmul.bf16 %v440, %v1169
      %v1191 = vmul.bf16 %v441, %v1169
      %v1213 = vrot.slane %v1171, 5
      %v1214 = vrot.slane %v1213, 4
      %v1215 = vrot.slane %v1172, 5
      %v1216 = vsel %vm797, %v1214, %v1215
      %v1217 = vrot.slane %v1215, 4
      %v1218 = vrot.slane %v1173, 5
      %v1219 = vsel %vm797, %v1217, %v1218
      %v1220 = vrot.slane %v1174, 5
      %v1221 = vrot.slane %v1220, 4
      %v1222 = vrot.slane %v1175, 5
      %v1223 = vsel %vm797, %v1221, %v1222
      %v1224 = vrot.slane %v1222, 4
      %v1225 = vrot.slane %v1176, 5
      %v1226 = vsel %vm797, %v1224, %v1225
      %v1227 = vrot.slane %v1177, 5
      %v1228 = vrot.slane %v1227, 4
      %v1229 = vrot.slane %v1178, 5
      %v1230 = vsel %vm797, %v1228, %v1229
      %v1231 = vrot.slane %v1229, 4
      %v1232 = vrot.slane %v1179, 5
      %v1233 = vsel %vm797, %v1231, %v1232
      %v1234 = vrot.slane %v1180, 5
      %v1235 = vrot.slane %v1234, 4
      %v1236 = vrot.slane %v1181, 5
      %v1237 = vsel %vm797, %v1235, %v1236
      %v1238 = vrot.slane %v1236, 4
      %v1239 = vrot.slane %v1182, 5
      %v1240 = vsel %vm797, %v1238, %v1239
      %v1241 = vrot.slane %v1183, 5
      %v1242 = vrot.slane %v1241, 4
      %v1243 = vrot.slane %v1184, 5
      %v1244 = vsel %vm797, %v1242, %v1243
      %v1245 = vrot.slane %v1243, 4
      %v1246 = vrot.slane %v1185, 5
      %v1247 = vsel %vm797, %v1245, %v1246
      %v1248 = vrot.slane %v1186, 5
      %v1249 = vrot.slane %v1248, 4
      %v1250 = vrot.slane %v1187, 5
      %v1251 = vsel %vm797, %v1249, %v1250
      %v1252 = vrot.slane %v1250, 4
      %v1253 = vrot.slane %v1188, 5
      %v1254 = vsel %vm797, %v1252, %v1253
      %v1255 = vrot.slane %v1189, 5
      %v1256 = vrot.slane %v1255, 4
      %v1257 = vrot.slane %v1190, 5
      %v1258 = vsel %vm797, %v1256, %v1257
      %v1259 = vrot.slane %v1257, 4
      %v1260 = vrot.slane %v1191, 5
      %v1261 = vsel %vm797, %v1259, %v1260
      %v1276 = vadd.bf16 %v1149, %v1216
      %v1277 = vadd.bf16 %v1150, %v1219
      %v1278 = vadd.bf16 %v1151, %v1223
      %v1279 = vadd.bf16 %v1152, %v1226
      %v1280 = vadd.bf16 %v1153, %v1230
      %v1281 = vadd.bf16 %v1154, %v1233
      %v1282 = vadd.bf16 %v1155, %v1237
      %v1283 = vadd.bf16 %v1156, %v1240
      %v1284 = vadd.bf16 %v1157, %v1244
      %v1285 = vadd.bf16 %v1158, %v1247
      %v1286 = vadd.bf16 %v1159, %v1251
      %v1287 = vadd.bf16 %v1160, %v1254
      %v1288 = vadd.bf16 %v1161, %v1258
      %v1289 = vadd.bf16 %v1162, %v1261
      %v1290 = vadd.bf16 %v902, %v1276
      %v1291 = vadd.bf16 %v903, %v1277
      %v1292 = vadd.bf16 %v904, %v1278
      %v1293 = vadd.bf16 %v905, %v1279
      %v1294 = vadd.bf16 %v906, %v1280
      %v1295 = vadd.bf16 %v907, %v1281
      %v1296 = vadd.bf16 %v908, %v1282
      %v1297 = vadd.bf16 %v909, %v1283
      %v1298 = vadd.bf16 %v910, %v1284
      %v1299 = vadd.bf16 %v911, %v1285
      %v1300 = vadd.bf16 %v912, %v1286
      %v1301 = vadd.bf16 %v913, %v1287
      %v1302 = vadd.bf16 %v914, %v1288
      %v1303 = vadd.bf16 %v915, %v1289
      %1304 = vst [vmem:[#allocation2] sm:$0xf] %v1290
      %1305 = vst [vmem:[#allocation2 + $0x4] sm:$0xf] %v1291
      %1306 = vst [vmem:[#allocation2 + $0x8] sm:$0xf] %v1292
      %1307 = vst [vmem:[#allocation2 + $0xc] sm:$0xf] %v1293
      %1308 = vst [vmem:[#allocation2 + $0x10] sm:$0xf] %v1294
      %1309 = vst [vmem:[#allocation2 + $0x14] sm:$0xf] %v1295
      %1310 = vst [vmem:[#allocation2 + $0x18] sm:$0xf] %v1296
      %1311 = vst [vmem:[#allocation2 + $0x1c] sm:$0xf] %v1297
      %1312 = vst [vmem:[#allocation2 + $0x20] sm:$0xf] %v1298
      %1313 = vst [vmem:[#allocation2 + $0x24] sm:$0xf] %v1299
      %1314 = vst [vmem:[#allocation2 + $0x28] sm:$0xf] %v1300
      %1315 = vst [vmem:[#allocation2 + $0x2c] sm:$0xf] %v1301
      %1316 = vst [vmem:[#allocation2 + $0x30] sm:$0xf] %v1302
      %1317 = vst [vmem:[#allocation2 + $0x34] sm:$0xf] %v1303
      %s1318 = scalar_lea.vmem [#allocation2], 56
      %v1319 = vld [vmem:[%s1318] sm:$0xf]
      %v1320 = vld [vmem:[%s1318 + $0x4] sm:$0xf]
      %v1321 = vmul.bf16 %v444, %v922
      %v1322 = vmul.bf16 %v445, %v922
      %v1323 = vmul.bf16 %v444, %v944
      %v1324 = vmul.bf16 %v445, %v944
      %v1325 = vmul.bf16 %v446, %v944
      %v1327 = vshrl.u32 %v1323, 16
      %v1329 = vrot.slane %v1327, 4
      %v1330 = vshll.u32 %v1323, 16
      %v1332 = vrot.slane %v1330, 5
      %v1333 = vor.u32 %v1329, %v1332
      %v1334 = vrot.slane %v1333, 4
      %v1336 = vshll.u32 %v1324, 16
      %v1338 = vrot.slane %v1336, 5
      %v1339 = vsel %vm514, %v1334, %v1338
      %v1340 = vshrl.u32 %v1324, 16
      %v1342 = vrot.slane %v1340, 4
      %v1343 = vor.u32 %v1342, %v1338
      %v1344 = vrot.slane %v1343, 4
      %v1346 = vshll.u32 %v1325, 16
      %v1348 = vrot.slane %v1346, 5
      %v1349 = vsel %vm514, %v1344, %v1348
      %v1352 = vadd.bf16 %v1321, %v1339
      %v1353 = vadd.bf16 %v1322, %v1349
      %v1354 = vmul.bf16 %v444, %v1169
      %v1355 = vmul.bf16 %v445, %v1169
      %v1356 = vmul.bf16 %v446, %v1169
      %v1360 = vrot.slane %v1354, 5
      %v1361 = vrot.slane %v1360, 4
      %v1362 = vrot.slane %v1355, 5
      %v1363 = vsel %vm797, %v1361, %v1362
      %v1364 = vrot.slane %v1362, 4
      %v1365 = vrot.slane %v1356, 5
      %v1366 = vsel %vm797, %v1364, %v1365
      %v1369 = vadd.bf16 %v1352, %v1363
      %v1370 = vadd.bf16 %v1353, %v1366
      %v1371 = vadd.bf16 %v1319, %v1369
      %v1372 = vadd.bf16 %v1320, %v1370
      %1373 = vst [vmem:[%s1318] sm:$0xf] %v1371
      %1374 = vst [vmem:[%s1318 + $0x4] sm:$0xf] %v1372
      %v1375 = vld [vmem:[#allocation2] sm:$0xf]
      %v1376 = vld [vmem:[#allocation2 + $0x4] sm:$0xf]
      %v1377 = vld [vmem:[#allocation2 + $0x8] sm:$0xf]
      %v1378 = vld [vmem:[#allocation2 + $0xc] sm:$0xf]
      %v1379 = vld [vmem:[#allocation2 + $0x10] sm:$0xf]
      %v1380 = vld [vmem:[#allocation2 + $0x14] sm:$0xf]
      %v1381 = vld [vmem:[#allocation2 + $0x18] sm:$0xf]
      %v1382 = vld [vmem:[#allocation2 + $0x1c] sm:$0xf]
      %v1383 = vld [vmem:[#allocation2 + $0x20] sm:$0xf]
      %v1384 = vld [vmem:[#allocation2 + $0x24] sm:$0xf]
      %v1385 = vld [vmem:[#allocation2 + $0x28] sm:$0xf]
      %v1386 = vld [vmem:[#allocation2 + $0x2c] sm:$0xf]
      %v1387 = vlaneseq
      %v1388 = vshrl.u32 %v1387, 7
      %v1389 = vsub.s32 3, %v1388
      %v1390 = vrot.slane %v451, %v1389
      %v1392 = vunpack.c.l.b16 %v1390
      %v1393 = vpack.c.b16 %v1392, %v1392
      %v1395 = vmul.bf16 %v424, %v1393
      %v1396 = vmul.bf16 %v425, %v1393
      %v1397 = vmul.bf16 %v427, %v1393
      %v1398 = vmul.bf16 %v428, %v1393
      %v1399 = vmul.bf16 %v430, %v1393
      %v1400 = vmul.bf16 %v431, %v1393
      %v1401 = vmul.bf16 %v433, %v1393
      %v1402 = vmul.bf16 %v434, %v1393
      %v1403 = vmul.bf16 %v436, %v1393
      %v1404 = vmul.bf16 %v437, %v1393
      %v1405 = vmul.bf16 %v439, %v1393
      %v1406 = vmul.bf16 %v440, %v1393
      %v1407 = vlaneseq
      %v1408 = vshrl.u32 %v1407, 7
      %v1409 = vsub.s32 3, %v1408
      %v1410 = vrot.slane %v478, %v1409
      %v1412 = vunpack.c.l.b16 %v1410
      %v1413 = vpack.c.b16 %v1412, %v1412
      %v1415 = vmul.bf16 %v424, %v1413
      %v1416 = vmul.bf16 %v425, %v1413
      %v1417 = vmul.bf16 %v426, %v1413
      %v1418 = vmul.bf16 %v427, %v1413
      %v1419 = vmul.bf16 %v428, %v1413
      %v1420 = vmul.bf16 %v429, %v1413
      %v1421 = vmul.bf16 %v430, %v1413
      %v1422 = vmul.bf16 %v431, %v1413
      %v1423 = vmul.bf16 %v432, %v1413
      %v1424 = vmul.bf16 %v433, %v1413
      %v1425 = vmul.bf16 %v434, %v1413
      %v1426 = vmul.bf16 %v435, %v1413
      %v1427 = vmul.bf16 %v436, %v1413
      %v1428 = vmul.bf16 %v437, %v1413
      %v1429 = vmul.bf16 %v438, %v1413
      %v1430 = vmul.bf16 %v439, %v1413
      %v1431 = vmul.bf16 %v440, %v1413
      %v1432 = vmul.bf16 %v441, %v1413
      %v1434 = vshrl.u32 %v1415, 16
      %v1436 = vrot.slane %v1434, 4
      %v1437 = vshll.u32 %v1415, 16
      %v1439 = vrot.slane %v1437, 5
      %v1440 = vor.u32 %v1436, %v1439
      %v1441 = vrot.slane %v1440, 4
      %v1443 = vshll.u32 %v1416, 16
      %v1445 = vrot.slane %v1443, 5
      %v1446 = vsel %vm514, %v1441, %v1445
      %v1447 = vshrl.u32 %v1416, 16
      %v1449 = vrot.slane %v1447, 4
      %v1450 = vor.u32 %v1449, %v1445
      %v1451 = vrot.slane %v1450, 4
      %v1453 = vshll.u32 %v1417, 16
      %v1455 = vrot.slane %v1453, 5
      %v1456 = vsel %vm514, %v1451, %v1455
      %v1458 = vshrl.u32 %v1418, 16
      %v1460 = vrot.slane %v1458, 4
      %v1461 = vshll.u32 %v1418, 16
      %v1463 = vrot.slane %v1461, 5
      %v1464 = vor.u32 %v1460, %v1463
      %v1465 = vrot.slane %v1464, 4
      %v1467 = vshll.u32 %v1419, 16
      %v1469 = vrot.slane %v1467, 5
      %v1470 = vsel %vm514, %v1465, %v1469
      %v1471 = vshrl.u32 %v1419, 16
      %v1473 = vrot.slane %v1471, 4
      %v1474 = vor.u32 %v1473, %v1469
      %v1475 = vrot.slane %v1474, 4
      %v1477 = vshll.u32 %v1420, 16
      %v1479 = vrot.slane %v1477, 5
      %v1480 = vsel %vm514, %v1475, %v1479
      %v1482 = vshrl.u32 %v1421, 16
      %v1484 = vrot.slane %v1482, 4
      %v1485 = vshll.u32 %v1421, 16
      %v1487 = vrot.slane %v1485, 5
      %v1488 = vor.u32 %v1484, %v1487
      %v1489 = vrot.slane %v1488, 4
      %v1491 = vshll.u32 %v1422, 16
      %v1493 = vrot.slane %v1491, 5
      %v1494 = vsel %vm514, %v1489, %v1493
      %v1495 = vshrl.u32 %v1422, 16
      %v1497 = vrot.slane %v1495, 4
      %v1498 = vor.u32 %v1497, %v1493
      %v1499 = vrot.slane %v1498, 4
      %v1501 = vshll.u32 %v1423, 16
      %v1503 = vrot.slane %v1501, 5
      %v1504 = vsel %vm514, %v1499, %v1503
      %v1506 = vshrl.u32 %v1424, 16
      %v1508 = vrot.slane %v1506, 4
      %v1509 = vshll.u32 %v1424, 16
      %v1511 = vrot.slane %v1509, 5
      %v1512 = vor.u32 %v1508, %v1511
      %v1513 = vrot.slane %v1512, 4
      %v1515 = vshll.u32 %v1425, 16
      %v1517 = vrot.slane %v1515, 5
      %v1518 = vsel %vm514, %v1513, %v1517
      %v1519 = vshrl.u32 %v1425, 16
      %v1521 = vrot.slane %v1519, 4
      %v1522 = vor.u32 %v1521, %v1517
      %v1523 = vrot.slane %v1522, 4
      %v1525 = vshll.u32 %v1426, 16
      %v1527 = vrot.slane %v1525, 5
      %v1528 = vsel %vm514, %v1523, %v1527
      %v1530 = vshrl.u32 %v1427, 16
      %v1532 = vrot.slane %v1530, 4
      %v1533 = vshll.u32 %v1427, 16
      %v1535 = vrot.slane %v1533, 5
      %v1536 = vor.u32 %v1532, %v1535
      %v1537 = vrot.slane %v1536, 4
      %v1539 = vshll.u32 %v1428, 16
      %v1541 = vrot.slane %v1539, 5
      %v1542 = vsel %vm514, %v1537, %v1541
      %v1543 = vshrl.u32 %v1428, 16
      %v1545 = vrot.slane %v1543, 4
      %v1546 = vor.u32 %v1545, %v1541
      %v1547 = vrot.slane %v1546, 4
      %v1549 = vshll.u32 %v1429, 16
      %v1551 = vrot.slane %v1549, 5
      %v1552 = vsel %vm514, %v1547, %v1551
      %v1554 = vshrl.u32 %v1430, 16
      %v1556 = vrot.slane %v1554, 4
      %v1557 = vshll.u32 %v1430, 16
      %v1559 = vrot.slane %v1557, 5
      %v1560 = vor.u32 %v1556, %v1559
      %v1561 = vrot.slane %v1560, 4
      %v1563 = vshll.u32 %v1431, 16
      %v1565 = vrot.slane %v1563, 5
      %v1566 = vsel %vm514, %v1561, %v1565
      %v1567 = vshrl.u32 %v1431, 16
      %v1569 = vrot.slane %v1567, 4
      %v1570 = vor.u32 %v1569, %v1565
      %v1571 = vrot.slane %v1570, 4
      %v1573 = vshll.u32 %v1432, 16
      %v1575 = vrot.slane %v1573, 5
      %v1576 = vsel %vm514, %v1571, %v1575
      %v1589 = vadd.bf16 %v1395, %v1446
      %v1590 = vadd.bf16 %v1396, %v1456
      %v1591 = vadd.bf16 %v1397, %v1470
      %v1592 = vadd.bf16 %v1398, %v1480
      %v1593 = vadd.bf16 %v1399, %v1494
      %v1594 = vadd.bf16 %v1400, %v1504
      %v1595 = vadd.bf16 %v1401, %v1518
      %v1596 = vadd.bf16 %v1402, %v1528
      %v1597 = vadd.bf16 %v1403, %v1542
      %v1598 = vadd.bf16 %v1404, %v1552
      %v1599 = vadd.bf16 %v1405, %v1566
      %v1600 = vadd.bf16 %v1406, %v1576
      %v1602 = vpack.i.b16 %v443, %v443
      %v1604 = vlaneseq
      %v1605 = vshrl.u32 %v1604, 7
      %v1606 = vsub.s32 0, %v1605
      %v1607 = vrot.slane %v1602, %v1606
      %v1609 = vunpack.c.l.b16 %v1607
      %v1610 = vpack.c.b16 %v1609, %v1609
      %v1612 = vmul.bf16 %v424, %v1610
      %v1613 = vmul.bf16 %v425, %v1610
      %v1614 = vmul.bf16 %v426, %v1610
      %v1615 = vmul.bf16 %v427, %v1610
      %v1616 = vmul.bf16 %v428, %v1610
      %v1617 = vmul.bf16 %v429, %v1610
      %v1618 = vmul.bf16 %v430, %v1610
      %v1619 = vmul.bf16 %v431, %v1610
      %v1620 = vmul.bf16 %v432, %v1610
      %v1621 = vmul.bf16 %v433, %v1610
      %v1622 = vmul.bf16 %v434, %v1610
      %v1623 = vmul.bf16 %v435, %v1610
      %v1624 = vmul.bf16 %v436, %v1610
      %v1625 = vmul.bf16 %v437, %v1610
      %v1626 = vmul.bf16 %v438, %v1610
      %v1627 = vmul.bf16 %v439, %v1610
      %v1628 = vmul.bf16 %v440, %v1610
      %v1629 = vmul.bf16 %v441, %v1610
      %v1648 = vrot.slane %v1612, 5
      %v1649 = vrot.slane %v1648, 4
      %v1650 = vrot.slane %v1613, 5
      %v1651 = vsel %vm797, %v1649, %v1650
      %v1652 = vrot.slane %v1650, 4
      %v1653 = vrot.slane %v1614, 5
      %v1654 = vsel %vm797, %v1652, %v1653
      %v1655 = vrot.slane %v1615, 5
      %v1656 = vrot.slane %v1655, 4
      %v1657 = vrot.slane %v1616, 5
      %v1658 = vsel %vm797, %v1656, %v1657
      %v1659 = vrot.slane %v1657, 4
      %v1660 = vrot.slane %v1617, 5
      %v1661 = vsel %vm797, %v1659, %v1660
      %v1662 = vrot.slane %v1618, 5
      %v1663 = vrot.slane %v1662, 4
      %v1664 = vrot.slane %v1619, 5
      %v1665 = vsel %vm797, %v1663, %v1664
      %v1666 = vrot.slane %v1664, 4
      %v1667 = vrot.slane %v1620, 5
      %v1668 = vsel %vm797, %v1666, %v1667
      %v1669 = vrot.slane %v1621, 5
      %v1670 = vrot.slane %v1669, 4
      %v1671 = vrot.slane %v1622, 5
      %v1672 = vsel %vm797, %v1670, %v1671
      %v1673 = vrot.slane %v1671, 4
      %v1674 = vrot.slane %v1623, 5
      %v1675 = vsel %vm797, %v1673, %v1674
      %v1676 = vrot.slane %v1624, 5
      %v1677 = vrot.slane %v1676, 4
      %v1678 = vrot.slane %v1625, 5
      %v1679 = vsel %vm797, %v1677, %v1678
      %v1680 = vrot.slane %v1678, 4
      %v1681 = vrot.slane %v1626, 5
      %v1682 = vsel %vm797, %v1680, %v1681
      %v1683 = vrot.slane %v1627, 5
      %v1684 = vrot.slane %v1683, 4
      %v1685 = vrot.slane %v1628, 5
      %v1686 = vsel %vm797, %v1684, %v1685
      %v1687 = vrot.slane %v1685, 4
      %v1688 = vrot.slane %v1629, 5
      %v1689 = vsel %vm797, %v1687, %v1688
      %v1702 = vadd.bf16 %v1589, %v1651
      %v1703 = vadd.bf16 %v1590, %v1654
      %v1704 = vadd.bf16 %v1591, %v1658
      %v1705 = vadd.bf16 %v1592, %v1661
      %v1706 = vadd.bf16 %v1593, %v1665
      %v1707 = vadd.bf16 %v1594, %v1668
      %v1708 = vadd.bf16 %v1595, %v1672
      %v1709 = vadd.bf16 %v1596, %v1675
      %v1710 = vadd.bf16 %v1597, %v1679
      %v1711 = vadd.bf16 %v1598, %v1682
      %v1712 = vadd.bf16 %v1599, %v1686
      %v1713 = vadd.bf16 %v1600, %v1689
      %v1714 = vadd.bf16 %v1375, %v1702
      %v1715 = vadd.bf16 %v1376, %v1703
      %v1716 = vadd.bf16 %v1377, %v1704
      %v1717 = vadd.bf16 %v1378, %v1705
      %v1718 = vadd.bf16 %v1379, %v1706
      %v1719 = vadd.bf16 %v1380, %v1707
      %v1720 = vadd.bf16 %v1381, %v1708
      %v1721 = vadd.bf16 %v1382, %v1709
      %v1722 = vadd.bf16 %v1383, %v1710
      %v1723 = vadd.bf16 %v1384, %v1711
      %v1724 = vadd.bf16 %v1385, %v1712
      %v1725 = vadd.bf16 %v1386, %v1713
      %1726 = vst [vmem:[#allocation2] sm:$0xf] %v1714
      %1727 = vst [vmem:[#allocation2 + $0x4] sm:$0xf] %v1715
      %1728 = vst [vmem:[#allocation2 + $0x8] sm:$0xf] %v1716
      %1729 = vst [vmem:[#allocation2 + $0xc] sm:$0xf] %v1717
      %1730 = vst [vmem:[#allocation2 + $0x10] sm:$0xf] %v1718
      %1731 = vst [vmem:[#allocation2 + $0x14] sm:$0xf] %v1719
      %1732 = vst [vmem:[#allocation2 + $0x18] sm:$0xf] %v1720
      %1733 = vst [vmem:[#allocation2 + $0x1c] sm:$0xf] %v1721
      %1734 = vst [vmem:[#allocation2 + $0x20] sm:$0xf] %v1722
      %1735 = vst [vmem:[#allocation2 + $0x24] sm:$0xf] %v1723
      %1736 = vst [vmem:[#allocation2 + $0x28] sm:$0xf] %v1724
      %1737 = vst [vmem:[#allocation2 + $0x2c] sm:$0xf] %v1725
      %s1738 = scalar_lea.vmem [#allocation2], 48
      %v1739 = vld [vmem:[%s1738] sm:$0xf]
      %v1740 = vld [vmem:[%s1738 + $0x4] sm:$0xf]
      %v1741 = vmul.bf16 %v444, %v1393
      %v1742 = vmul.bf16 %v445, %v1393
      %v1743 = vmul.bf16 %v444, %v1413
      %v1744 = vmul.bf16 %v445, %v1413
      %v1745 = vmul.bf16 %v446, %v1413
      %v1747 = vshrl.u32 %v1743, 16
      %v1749 = vrot.slane %v1747, 4
      %v1750 = vshll.u32 %v1743, 16
      %v1752 = vrot.slane %v1750, 5
      %v1753 = vor.u32 %v1749, %v1752
      %v1754 = vrot.slane %v1753, 4
      %v1756 = vshll.u32 %v1744, 16
      %v1758 = vrot.slane %v1756, 5
      %v1759 = vsel %vm514, %v1754, %v1758
      %v1760 = vshrl.u32 %v1744, 16
      %v1762 = vrot.slane %v1760, 4
      %v1763 = vor.u32 %v1762, %v1758
      %v1764 = vrot.slane %v1763, 4
      %v1766 = vshll.u32 %v1745, 16
      %v1768 = vrot.slane %v1766, 5
      %v1769 = vsel %vm514, %v1764, %v1768
      %v1772 = vadd.bf16 %v1741, %v1759
      %v1773 = vadd.bf16 %v1742, %v1769
      %v1774 = vmul.bf16 %v444, %v1610
      %v1775 = vmul.bf16 %v445, %v1610
      %v1776 = vmul.bf16 %v446, %v1610
      %v1780 = vrot.slane %v1774, 5
      %v1781 = vrot.slane %v1780, 4
      %v1782 = vrot.slane %v1775, 5
      %v1783 = vsel %vm797, %v1781, %v1782
      %v1784 = vrot.slane %v1782, 4
      %v1785 = vrot.slane %v1776, 5
      %v1786 = vsel %vm797, %v1784, %v1785
      %v1789 = vadd.bf16 %v1772, %v1783
      %v1790 = vadd.bf16 %v1773, %v1786
      %v1791 = vadd.bf16 %v1739, %v1789
      %v1792 = vadd.bf16 %v1740, %v1790
      %1793 = vst [vmem:[%s1738] sm:$0xf] %v1791
      %1794 = vst [vmem:[%s1738 + $0x4] sm:$0xf] %v1792
      %v1795 = vld [vmem:[%s1318] sm:$0xf]
      %v1796 = vld [vmem:[%s1318 + $0x4] sm:$0xf]
      %v1797 = vmul.bf16 %v447, %v1393
      %v1798 = vmul.bf16 %v448, %v1393
      %v1799 = vmul.bf16 %v447, %v1413
      %v1800 = vmul.bf16 %v448, %v1413
      %v1801 = vmul.bf16 %v449, %v1413
      %v1803 = vshrl.u32 %v1799, 16
      %v1805 = vrot.slane %v1803, 4
      %v1806 = vshll.u32 %v1799, 16
      %v1808 = vrot.slane %v1806, 5
      %v1809 = vor.u32 %v1805, %v1808
      %v1810 = vrot.slane %v1809, 4
      %v1812 = vshll.u32 %v1800, 16
      %v1814 = vrot.slane %v1812, 5
      %v1815 = vsel %vm514, %v1810, %v1814
      %v1816 = vshrl.u32 %v1800, 16
      %v1818 = vrot.slane %v1816, 4
      %v1819 = vor.u32 %v1818, %v1814
      %v1820 = vrot.slane %v1819, 4
      %v1822 = vshll.u32 %v1801, 16
      %v1824 = vrot.slane %v1822, 5
      %v1825 = vsel %vm514, %v1820, %v1824
      %v1828 = vadd.bf16 %v1797, %v1815
      %v1829 = vadd.bf16 %v1798, %v1825
      %v1830 = vmul.bf16 %v447, %v1610
      %v1831 = vmul.bf16 %v448, %v1610
      %v1832 = vmul.bf16 %v449, %v1610
      %v1836 = vrot.slane %v1830, 5
      %v1837 = vrot.slane %v1836, 4
      %v1838 = vrot.slane %v1831, 5
      %v1839 = vsel %vm797, %v1837, %v1838
      %v1840 = vrot.slane %v1838, 4
      %v1841 = vrot.slane %v1832, 5
      %v1842 = vsel %vm797, %v1840, %v1841
      %v1845 = vadd.bf16 %v1828, %v1839
      %v1846 = vadd.bf16 %v1829, %v1842
      %v1847 = vadd.bf16 %v1795, %v1845
      %v1848 = vadd.bf16 %v1796, %v1846
      %1849 = vst [vmem:[%s1318] sm:$0xf] %v1847
      %1850 = vst [vmem:[%s1318 + $0x4] sm:$0xf] %v1848
      %v1851 = vld [vmem:[#allocation2] sm:$0xf]
      %v1852 = vld [vmem:[#allocation2 + $0x4] sm:$0xf]
      %v1853 = vld [vmem:[#allocation2 + $0x8] sm:$0xf]
      %v1854 = vld [vmem:[#allocation2 + $0xc] sm:$0xf]
      %v1855 = vld [vmem:[#allocation2 + $0x10] sm:$0xf]
      %v1856 = vld [vmem:[#allocation2 + $0x14] sm:$0xf]
      %v1857 = vld [vmem:[#allocation2 + $0x18] sm:$0xf]
      %v1858 = vld [vmem:[#allocation2 + $0x1c] sm:$0xf]
      %v1859 = vld [vmem:[#allocation2 + $0x20] sm:$0xf]
      %v1860 = vld [vmem:[#allocation2 + $0x24] sm:$0xf]
      %v1861 = vld [vmem:[#allocation2 + $0x28] sm:$0xf]
      %v1862 = vld [vmem:[#allocation2 + $0x2c] sm:$0xf]
      %v1863 = vld [vmem:[#allocation2 + $0x30] sm:$0xf]
      %v1864 = vld [vmem:[#allocation2 + $0x34] sm:$0xf]
      %v1865 = vld [vmem:[#allocation2 + $0x38] sm:$0xf]
      %v1866 = vld [vmem:[#allocation2 + $0x3c] sm:$0xf]
      %v1867 = vld [vmem:[%s5] sm:$0xf]
      %v1868 = vld [vmem:[%s5 + $0x4] sm:$0xf]
      %v1869 = vld [vmem:[%s5 + $0x8] sm:$0xf]
      %v1870 = vld [vmem:[%s5 + $0xc] sm:$0xf]
      %v1871 = vld [vmem:[%s5 + $0x10] sm:$0xf]
      %v1872 = vld [vmem:[%s5 + $0x14] sm:$0xf]
      %v1873 = vld [vmem:[%s5 + $0x18] sm:$0xf]
      %v1874 = vld [vmem:[%s5 + $0x1c] sm:$0xf]
      %v1875 = vld [vmem:[%s5 + $0x20] sm:$0xf]
      %v1876 = vld [vmem:[%s5 + $0x24] sm:$0xf]
      %v1877 = vld [vmem:[%s5 + $0x28] sm:$0xf]
      %v1878 = vld [vmem:[%s5 + $0x2c] sm:$0xf]
      %v1879 = vld [vmem:[%s5 + $0x30] sm:$0xf]
      %v1880 = vld [vmem:[%s5 + $0x34] sm:$0xf]
      %v1881 = vld [vmem:[%s5 + $0x38] sm:$0xf]
      %v1882 = vld [vmem:[%s5 + $0x3c] sm:$0xf]
      %v1883 = vld [vmem:[%s4] sm:$0x1]
      %v1885 = vlaneseq
      %v1886 = vshrl.u32 %v1885, 7
      %v1887 = vsub.s32 0, %v1886
      %v1888 = vrot.slane %v1883, %v1887
      %v1906 = vunpack.c.l.b16 %v1851
      %v1907 = vunpack.c.l.b16 %v1852
      %v1908 = vunpack.c.l.b16 %v1853
      %v1909 = vunpack.c.l.b16 %v1854
      %v1910 = vunpack.c.l.b16 %v1855
      %v1911 = vunpack.c.l.b16 %v1856
      %v1912 = vunpack.c.l.b16 %v1857
      %v1913 = vunpack.c.l.b16 %v1858
      %v1914 = vunpack.c.l.b16 %v1859
      %v1915 = vunpack.c.l.b16 %v1860
      %v1916 = vunpack.c.l.b16 %v1861
      %v1917 = vunpack.c.l.b16 %v1862
      %v1918 = vunpack.c.l.b16 %v1863
      %v1919 = vunpack.c.l.b16 %v1864
      %v1920 = vunpack.c.l.b16 %v1865
      %v1921 = vunpack.c.l.b16 %v1866
      %v1922 = vpack.c.b16 %v1907, %v1906
      %v1923 = vpack.c.b16 %v1909, %v1908
      %v1924 = vpack.c.b16 %v1911, %v1910
      %v1925 = vpack.c.b16 %v1913, %v1912
      %v1926 = vpack.c.b16 %v1915, %v1914
      %v1927 = vpack.c.b16 %v1917, %v1916
      %v1928 = vpack.c.b16 %v1919, %v1918
      %v1929 = vpack.c.b16 %v1921, %v1920
      %v1954 = vunpack.c.l.b16 %v1867
      %v1955 = vunpack.c.l.b16 %v1868
      %v1956 = vunpack.c.l.b16 %v1869
      %v1957 = vunpack.c.l.b16 %v1870
      %v1958 = vunpack.c.l.b16 %v1871
      %v1959 = vunpack.c.l.b16 %v1872
      %v1960 = vunpack.c.l.b16 %v1873
      %v1961 = vunpack.c.l.b16 %v1874
      %v1962 = vunpack.c.l.b16 %v1875
      %v1963 = vunpack.c.l.b16 %v1876
      %v1964 = vunpack.c.l.b16 %v1877
      %v1965 = vunpack.c.l.b16 %v1878
      %v1966 = vunpack.c.l.b16 %v1879
      %v1967 = vunpack.c.l.b16 %v1880
      %v1968 = vunpack.c.l.b16 %v1881
      %v1969 = vunpack.c.l.b16 %v1882
      %v1970 = vpack.c.b16 %v1955, %v1954
      %v1971 = vpack.c.b16 %v1957, %v1956
      %v1972 = vpack.c.b16 %v1959, %v1958
      %v1973 = vpack.c.b16 %v1961, %v1960
      %v1974 = vpack.c.b16 %v1963, %v1962
      %v1975 = vpack.c.b16 %v1965, %v1964
      %v1976 = vpack.c.b16 %v1967, %v1966
      %v1977 = vpack.c.b16 %v1969, %v1968
      %1986 = vmatprep.subr.bf16.mxu0 0
      %1987 = vmatpush1.bf16.msra.mxu0 %v1977
      %1988 = vmatprep.subr.bf16.mxu0 0
      %1989 = vmatpush1.bf16.msra.mxu0 %v1976
      %1990 = vmatprep.subr.bf16.mxu0 0
      %1991 = vmatpush1.bf16.msra.mxu0 %v1975
      %1992 = vmatprep.subr.bf16.mxu0 0
      %1993 = vmatpush1.bf16.msra.mxu0 %v1974
      %1994 = vmatprep.subr.bf16.mxu0 0
      %1995 = vmatpush1.bf16.msra.mxu0 %v1973
      %1996 = vmatprep.subr.bf16.mxu0 0
      %1997 = vmatpush1.bf16.msra.mxu0 %v1972
      %1998 = vmatprep.subr.bf16.mxu0 0
      %1999 = vmatpush1.bf16.msra.mxu0 %v1971
      %2000 = vmatprep.subr.bf16.mxu0 0
      %2001 = vmatpush1.bf16.msra.mxu0 %v1970
      %2002 = vmatprep.subr.bf16.mxu0 0
      %2003 = vmatpush2.bf16.msra.mxu0 0
      %2004 = vmatprep.subr.bf16.mxu0 0
      %2005 = vmatpush2.bf16.msra.mxu0 0
      %2006 = vmatprep.subr.bf16.mxu0 0
      %2007 = vmatpush2.bf16.msra.mxu0 0
      %2008 = vmatprep.subr.bf16.mxu0 0
      %2009 = vmatpush2.bf16.msra.mxu0 0
      %2010 = vmatprep.subr.bf16.mxu0 0
      %2011 = vmatpush2.bf16.msra.mxu0 0
      %2012 = vmatprep.subr.bf16.mxu0 0
      %2013 = vmatpush2.bf16.msra.mxu0 0
      %2014 = vmatprep.subr.bf16.mxu0 0
      %2015 = vmatpush2.bf16.msra.mxu0 0
      %2016 = vmatprep.subr.bf16.mxu0 0
      %2017 = vmatpush2.bf16.msra.mxu0 0
      %2018 = vmatprep.mubr.bf16.mxu0 0
      %2019 = vmatmul.mubr.bf16.gmra.mxu0 %v1922
      %v2020 = vpop.f32.mrf.mxu0
      %v2021 = vadd.f32 %v1888, %v2020
      %v2022 = vpop.f32.mrf.mxu0
      %v2023 = vpop.f32.mrf.mxu0
      %v2024 = vadd.f32 %v1888, %v2023
      %v2025 = vpop.f32.mrf.mxu0
      %2026 = vmatprep.mubr.bf16.mxu0 0
      %2027 = vmatmul.mubr.bf16.gmra.mxu0 %v1923
      %v2028 = vpop.f32.mrf.mxu0
      %v2029 = vadd.f32 %v1888, %v2028
      %v2030 = vpop.f32.mrf.mxu0
      %v2031 = vpop.f32.mrf.mxu0
      %v2032 = vadd.f32 %v1888, %v2031
      %v2033 = vpop.f32.mrf.mxu0
      %2034 = vmatprep.mubr.bf16.mxu0 0
      %2035 = vmatmul.mubr.bf16.gmra.mxu0 %v1924
      %v2036 = vpop.f32.mrf.mxu0
      %v2037 = vadd.f32 %v1888, %v2036
      %v2038 = vpop.f32.mrf.mxu0
      %v2039 = vpop.f32.mrf.mxu0
      %v2040 = vadd.f32 %v1888, %v2039
      %v2041 = vpop.f32.mrf.mxu0
      %2042 = vmatprep.mubr.bf16.mxu0 0
      %2043 = vmatmul.mubr.bf16.gmra.mxu0 %v1925
      %v2044 = vpop.f32.mrf.mxu0
      %v2045 = vadd.f32 %v1888, %v2044
      %v2046 = vpop.f32.mrf.mxu0
      %v2047 = vpop.f32.mrf.mxu0
      %v2048 = vadd.f32 %v1888, %v2047
      %v2049 = vpop.f32.mrf.mxu0
      %2050 = vmatprep.mubr.bf16.mxu0 0
      %2051 = vmatmul.mubr.bf16.gmra.mxu0 %v1926
      %v2052 = vpop.f32.mrf.mxu0
      %v2053 = vadd.f32 %v1888, %v2052
      %v2054 = vpop.f32.mrf.mxu0
      %v2055 = vpop.f32.mrf.mxu0
      %v2056 = vadd.f32 %v1888, %v2055
      %v2057 = vpop.f32.mrf.mxu0
      %2058 = vmatprep.mubr.bf16.mxu0 0
      %2059 = vmatmul.mubr.bf16.gmra.mxu0 %v1927
      %v2060 = vpop.f32.mrf.mxu0
      %v2061 = vadd.f32 %v1888, %v2060
      %v2062 = vpop.f32.mrf.mxu0
      %v2063 = vpop.f32.mrf.mxu0
      %v2064 = vadd.f32 %v1888, %v2063
      %v2065 = vpop.f32.mrf.mxu0
      %2066 = vmatprep.mubr.bf16.mxu0 0
      %2067 = vmatmul.mubr.bf16.gmra.mxu0 %v1928
      %v2068 = vpop.f32.mrf.mxu0
      %v2069 = vadd.f32 %v1888, %v2068
      %v2070 = vpop.f32.mrf.mxu0
      %v2071 = vpop.f32.mrf.mxu0
      %v2072 = vadd.f32 %v1888, %v2071
      %v2073 = vpop.f32.mrf.mxu0
      %2074 = vmatprep.mubr.bf16.mxu0 0
      %2075 = vmatmul.mubr.bf16.gmra.mxu0 %v1929
      %v2076 = vpop.f32.mrf.mxu0
      %v2077 = vadd.f32 %v1888, %v2076
      %v2078 = vpop.f32.mrf.mxu0
      %v2079 = vpop.f32.mrf.mxu0
      %v2080 = vadd.f32 %v1888, %v2079
      %v2081 = vpop.f32.mrf.mxu0
      %2082 = vdwg.mxu0
      %v2083 = vpack.c.bf16 %v2024, %v2021
      %v2084 = vpack.c.bf16 %v2032, %v2029
      %v2085 = vpack.c.bf16 %v2040, %v2037
      %v2086 = vpack.c.bf16 %v2048, %v2045
      %v2087 = vpack.c.bf16 %v2056, %v2053
      %v2088 = vpack.c.bf16 %v2064, %v2061
      %v2089 = vpack.c.bf16 %v2072, %v2069
      %v2090 = vpack.c.bf16 %v2080, %v2077
      %v2099 = vunpack.c.l.b16 %v2083
      %v2100 = vunpack.c.h.b16 %v2083
      %v2101 = vunpack.c.l.b16 %v2084
      %v2102 = vunpack.c.h.b16 %v2084
      %v2103 = vunpack.c.l.b16 %v2085
      %v2104 = vunpack.c.h.b16 %v2085
      %v2105 = vunpack.c.l.b16 %v2086
      %v2106 = vunpack.c.h.b16 %v2086
      %v2107 = vunpack.c.l.b16 %v2087
      %v2108 = vunpack.c.h.b16 %v2087
      %v2109 = vunpack.c.l.b16 %v2088
      %v2110 = vunpack.c.h.b16 %v2088
      %v2111 = vunpack.c.l.b16 %v2089
      %v2112 = vunpack.c.h.b16 %v2089
      %v2113 = vunpack.c.l.b16 %v2090
      %v2114 = vunpack.c.h.b16 %v2090
      %v2115 = vpack.c.b16 %v2099, %v2099
      %v2116 = vpack.c.b16 %v2100, %v2100
      %v2117 = vpack.c.b16 %v2101, %v2101
      %v2118 = vpack.c.b16 %v2102, %v2102
      %v2119 = vpack.c.b16 %v2103, %v2103
      %v2120 = vpack.c.b16 %v2104, %v2104
      %v2121 = vpack.c.b16 %v2105, %v2105
      %v2122 = vpack.c.b16 %v2106, %v2106
      %v2123 = vpack.c.b16 %v2107, %v2107
      %v2124 = vpack.c.b16 %v2108, %v2108
      %v2125 = vpack.c.b16 %v2109, %v2109
      %v2126 = vpack.c.b16 %v2110, %v2110
      %v2127 = vpack.c.b16 %v2111, %v2111
      %v2128 = vpack.c.b16 %v2112, %v2112
      %v2129 = vpack.c.b16 %v2113, %v2113
      %v2130 = vpack.c.b16 %v2114, %v2114
      %vm2147 = vcmask 60416
      %2148 = vst.msk [vmem:[%s415] sm:$0xf] %vm2147, %v2115
      %2149 = vst.msk [vmem:[%s415 + $0x4] sm:$0xf] %vm2147, %v2116
      %2150 = vst.msk [vmem:[%s415 + $0x8] sm:$0xf] %vm2147, %v2117
      %2151 = vst.msk [vmem:[%s415 + $0xc] sm:$0xf] %vm2147, %v2118
      %2152 = vst.msk [vmem:[%s415 + $0x10] sm:$0xf] %vm2147, %v2119
      %2153 = vst.msk [vmem:[%s415 + $0x14] sm:$0xf] %vm2147, %v2120
      %2154 = vst.msk [vmem:[%s415 + $0x18] sm:$0xf] %vm2147, %v2121
      %2155 = vst.msk [vmem:[%s415 + $0x1c] sm:$0xf] %vm2147, %v2122
      %2156 = vst.msk [vmem:[%s415 + $0x20] sm:$0xf] %vm2147, %v2123
      %2157 = vst.msk [vmem:[%s415 + $0x24] sm:$0xf] %vm2147, %v2124
      %2158 = vst.msk [vmem:[%s415 + $0x28] sm:$0xf] %vm2147, %v2125
      %2159 = vst.msk [vmem:[%s415 + $0x2c] sm:$0xf] %vm2147, %v2126
      %2160 = vst.msk [vmem:[%s415 + $0x30] sm:$0xf] %vm2147, %v2127
      %2161 = vst.msk [vmem:[%s415 + $0x34] sm:$0xf] %vm2147, %v2128
      %2162 = vst.msk [vmem:[%s415 + $0x38] sm:$0xf] %vm2147, %v2129
      %2163 = vst.msk [vmem:[%s415 + $0x3c] sm:$0xf] %vm2147, %v2130
      %s2164 = smul.u32 8, %s22
      %p2165 = scmp.lt.s32.totalorder %s21, 1
      %s2166 = scalar_select %p2165, %s21, 1
      %p2167 = scmp.lt.s32.totalorder %s2164, 15
      %s2168 = scalar_select %p2167, %s2164, 15
      %s2169 = smul.addr %s2168, 2
      %s2170 = smul.addr %s2166, 32
      %s2171 = sadd.s32 %s2169, %s2170
      %s2172 = smul.addr %s2171, 4
      %s2173 = scalar_lea.vmem %s6, %s2172
      // Predicated region
      $region45: #{tpu_custom_call.1} parent=43 // pred_check
        %p2174 = pneg %p204
      $region46: #{tpu_custom_call.1} parent=43 // pred_check_branch
        %2176 = sbr.rel (%p2174) target = $region48
      $region47: #{tpu_custom_call.1} parent=43 // pred_region
        %s2177 = smul.u32 8, %s22
      $region48: #{tpu_custom_call.1} parent=43 // pred_fallthru
        _
    $region44: #{tpu_custom_call.1} parent=5 // pred_fallthru
      _
    %p2178 = scmp.le.s32.totalorder 2, %s12
    // Predicated region
    $region49: #{tpu_custom_call.1} parent=5 // pred_check
      %p2179 = pneg %p2178
    $region50: #{tpu_custom_call.1} parent=5 // pred_check_branch
      %2181 = sbr.rel (%p2179) target = $region52
    $region51: #{tpu_custom_call.1} parent=5 // pred_region
      %s2182 = ssub.s32 %s12, 2
      // Predicated region
      $region53: #{tpu_custom_call.1} parent=51 // pred_check
        %p2183 = pneg %p210
      $region54: #{tpu_custom_call.1} parent=51 // pred_check_branch
        %2185 = sbr.rel (%p2183) target = $region56
      $region55: #{tpu_custom_call.1} parent=51 // pred_region
        %s2186 = smul.u32 8, %s24
        %p2187 = scmp.lt.s32.totalorder %s23, 1
        %s2188 = scalar_select %p2187, %s23, 1
        %p2189 = scmp.lt.s32.totalorder %s2186, 15
        %s2190 = scalar_select %p2189, %s2186, 15
        %s2191 = smul.addr %s2190, 2
        %s2192 = smul.addr %s2188, 32
        %s2193 = sadd.s32 %s2191, %s2192
        %s2194 = smul.addr %s2193, 4
        %s2195 = scalar_lea.vmem %s6, %s2194
      $region56: #{tpu_custom_call.1} parent=51 // pred_fallthru
        _
    $region52: #{tpu_custom_call.1} parent=5 // pred_fallthru
      _
  $region6: #{tpu_custom_call.1} parent=0 // loop_footer
    %s16 = sadd.s32 1, %s12
  $region7: #{tpu_custom_call.1} parent=0 // loop_footer_branch
    %11 = sbr.rel target = $region3
  $region8: #{tpu_custom_call.1} parent=0 // loop_exit
    _

</llo_original>
